<compile_context>
chip_gen: v7x
topology: tpu7x:2x2x1
jax: 0.10.0
libtpu: 0.0.40
codegen_flags: <defaults>
</compile_context>

<pallas_src>
import jax
import jax.numpy as jnp
from jax.experimental import pallas as pl
from jax.experimental.pallas import tpu as pltpu


def nnue_kernel(xt_ref, w1_ref, b1_ref, w2_ref, b2_ref, w3_ref, b3_ref, o_ref):
    # fc1 + relu1 : (H, F_pad) @ (F_pad, TB) -> (H, TB), bias broadcast over lanes
    h1 = jnp.dot(w1_ref[...], xt_ref[...], preferred_element_type=jnp.float32)
    h1 = jnp.maximum(h1 + b1_ref[...], 0.0)
    # fc2 + relu2 : (H, H) @ (H, TB) -> (H, TB)
    h2 = jnp.dot(w2_ref[...], h1, preferred_element_type=jnp.float32)
    h2 = jnp.maximum(h2 + b2_ref[...], 0.0)
    # fc3 (out_features=1): VPU multiply + sublane (XLU) reduction instead of an
    # N=1 MXU matmul; result is already a lane-dense (1, TB) row.
    out = jnp.sum(h2 * w3_ref[...], axis=0, keepdims=True) + b3_ref[...]
    o_ref[...] = out.astype(o_ref.dtype)


def nnue_forward(x, w1, b1, w2, b2, w3, b3, *, tb=512):
    """Forward pass.  x: [B, F];  w*: PyTorch layout [out, in];  b*: [out, 1]."""
    B, F = x.shape
    H = w1.shape[0]

    F_pad = pl.cdiv(F, 128) * 128            # 787 -> 896
    B_pad = max(pl.cdiv(B, tb) * tb, tb)     # round batch up to tile multiple

    # Layout plumbing on the host side: zero-pad and transpose the activation
    # stream to [F_pad, B_pad]; zero-pad w1's K dim (zeros keep results exact).
    xt = jnp.zeros((F_pad, B_pad), x.dtype).at[:F, :B].set(x.T)
    w1p = jnp.zeros((H, F_pad), w1.dtype).at[:, :F].set(w1)
    w3c = w3.reshape(H, 1)                   # (1, H) -> (H, 1) column

    grid = (B_pad // tb,)
    resident = lambda shape: pl.BlockSpec(shape, lambda i: (0, 0))  # VMEM-resident

    out = pl.pallas_call(
        nnue_kernel,
        out_shape=jax.ShapeDtypeStruct((1, B_pad), jnp.float32),
        grid=grid,
        in_specs=[
            pl.BlockSpec((F_pad, tb), lambda i: (0, i)),   # x tile, pipelined
            resident((H, F_pad)),                          # w1
            resident((H, 1)),                              # b1
            resident((H, H)),                              # w2
            resident((H, 1)),                              # b2
            resident((H, 1)),                              # w3 (column)
            resident((1, 1)),                              # b3
        ],
        out_specs=pl.BlockSpec((1, tb), lambda i: (0, i)),  # lane-dense output row
        compiler_params=pltpu.CompilerParams(
            dimension_semantics=("parallel",)),
    )(xt, w1p, b1, w2, b2, w3c, b3)

    return out[0, :B].reshape(B, 1)


def init_params(key, input_size=787, hidden_size=64):
    """Deterministic init mimicking PyTorch nn.Linear (uniform +-1/sqrt(fan_in)).
    Weights are kept in PyTorch layout [out, in]; biases as columns [out, 1]."""
    ks = jax.random.split(key, 6)

    def linear(kw, kb, fan_in, fan_out):
        bound = 1.0 / float(fan_in) ** 0.5
        w = jax.random.uniform(kw, (fan_out, fan_in), jnp.float32, -bound, bound)
        b = jax.random.uniform(kb, (fan_out, 1), jnp.float32, -bound, bound)
        return w, b

    w1, b1 = linear(ks[0], ks[1], input_size, hidden_size)
    w2, b2 = linear(ks[2], ks[3], hidden_size, hidden_size)
    w3, b3 = linear(ks[4], ks[5], hidden_size, 1)
    return w1, b1, w2, b2, w3, b3


def reference_forward(x, w1, b1, w2, b2, w3, b3):
    hi = jax.lax.Precision.HIGHEST
    h1 = jnp.maximum(jnp.dot(x, w1.T, precision=hi) + b1.T, 0.0)
    h2 = jnp.maximum(jnp.dot(h1, w2.T, precision=hi) + b2.T, 0.0)
    return jnp.dot(h2, w3.T, precision=hi) + b3.T


if __name__ == "__main__":
    INPUT_SIZE = 787
    HIDDEN_SIZE = 64
    BATCH = 1000  # not a tile multiple -> exercises batch padding + a 2-step grid

    key = jax.random.PRNGKey(0)
    k_x, k_p = jax.random.split(key)

    x = jax.random.normal(k_x, (BATCH, INPUT_SIZE), jnp.float32)
    params = init_params(k_p, INPUT_SIZE, HIDDEN_SIZE)

    out = nnue_forward(x, *params, tb=512)
    out = jax.block_until_ready(out)

    ref = reference_forward(x, *params)
    assert out.shape == (BATCH, 1), out.shape
    assert jnp.allclose(out, ref, atol=1e-3, rtol=1e-3), (
        "mismatch vs JAX reference: max abs diff "
        f"{float(jnp.max(jnp.abs(out - ref)))}")

    print("KERNEL_OK")
</pallas_src>

<mosaic_0001>
module attributes {stable_mosaic.version = 11 : i64} {
  func.func @nnue_kernel(%arg0: i32, %arg1: memref<896x512xf32, #tpu.memory_space<vmem>>, %arg2: memref<64x896xf32, #tpu.memory_space<vmem>>, %arg3: memref<64x1xf32, #tpu.memory_space<vmem>>, %arg4: memref<64x64xf32, #tpu.memory_space<vmem>>, %arg5: memref<64x1xf32, #tpu.memory_space<vmem>>, %arg6: memref<64x1xf32, #tpu.memory_space<vmem>>, %arg7: memref<1x1xf32, #tpu.memory_space<vmem>>, %arg8: memref<1x512xf32, #tpu.memory_space<vmem>>) attributes {dimension_semantics = [#tpu.dimension_semantics<parallel>], iteration_bounds = array<i64: 2>, scalar_prefetch = 0 : i64, scratch_operands = 0 : i64, tpu.core_type = #tpu.core_type<tc>, window_params = [{transform_indices = @transform_0, window_bounds = array<i64: 896, 512>}, {pipeline_mode = #tpu.pipeline_mode<synchronous>, transform_indices = @transform_1, window_bounds = array<i64: 64, 896>}, {pipeline_mode = #tpu.pipeline_mode<synchronous>, transform_indices = @transform_2, window_bounds = array<i64: 64, 1>}, {pipeline_mode = #tpu.pipeline_mode<synchronous>, transform_indices = @transform_3, window_bounds = array<i64: 64, 64>}, {pipeline_mode = #tpu.pipeline_mode<synchronous>, transform_indices = @transform_4, window_bounds = array<i64: 64, 1>}, {pipeline_mode = #tpu.pipeline_mode<synchronous>, transform_indices = @transform_5, window_bounds = array<i64: 64, 1>}, {pipeline_mode = #tpu.pipeline_mode<synchronous>, transform_indices = @transform_6, window_bounds = array<i64: 1, 1>}, {transform_indices = @transform_7, window_bounds = array<i64: 1, 512>}]} {
    %c0 = arith.constant 0 : index
    %c0_0 = arith.constant 0 : index
    %0 = vector.load %arg2[%c0, %c0_0] : memref<64x896xf32, #tpu.memory_space<vmem>>, vector<64x896xf32>
    %c0_1 = arith.constant 0 : index
    %c0_2 = arith.constant 0 : index
    %1 = vector.load %arg1[%c0_1, %c0_2] : memref<896x512xf32, #tpu.memory_space<vmem>>, vector<896x512xf32>
    %cst = arith.constant dense<0.000000e+00> : vector<64x512xf32>
    %2 = tpu.matmul %0, %1, %cst {dimension_numbers = #tpu.dot_dimension_numbers<[1], [0], [0], [1], [0, 0, 1, 1], [], []>} : vector<64x896xf32>, vector<896x512xf32>, vector<64x512xf32> -> vector<64x512xf32>
    %c0_3 = arith.constant 0 : index
    %c0_4 = arith.constant 0 : index
    %3 = vector.load %arg3[%c0_3, %c0_4] : memref<64x1xf32, #tpu.memory_space<vmem>>, vector<64x1xf32>
    %4 = vector.broadcast %3 : vector<64x1xf32> to vector<64x512xf32>
    %5 = arith.addf %2, %4 : vector<64x512xf32>
    %cst_5 = arith.constant 0.000000e+00 : f32
    %6 = vector.broadcast %cst_5 : f32 to vector<64x512xf32>
    %7 = arith.maximumf %5, %6 : vector<64x512xf32>
    %c0_6 = arith.constant 0 : index
    %c0_7 = arith.constant 0 : index
    %8 = vector.load %arg4[%c0_6, %c0_7] : memref<64x64xf32, #tpu.memory_space<vmem>>, vector<64x64xf32>
    %cst_8 = arith.constant dense<0.000000e+00> : vector<64x512xf32>
    %9 = tpu.matmul %8, %7, %cst_8 {dimension_numbers = #tpu.dot_dimension_numbers<[1], [0], [0], [1], [0, 0, 1, 1], [], []>} : vector<64x64xf32>, vector<64x512xf32>, vector<64x512xf32> -> vector<64x512xf32>
    %c0_9 = arith.constant 0 : index
    %c0_10 = arith.constant 0 : index
    %10 = vector.load %arg5[%c0_9, %c0_10] : memref<64x1xf32, #tpu.memory_space<vmem>>, vector<64x1xf32>
    %11 = vector.broadcast %10 : vector<64x1xf32> to vector<64x512xf32>
    %12 = arith.addf %9, %11 : vector<64x512xf32>
    %cst_11 = arith.constant 0.000000e+00 : f32
    %13 = vector.broadcast %cst_11 : f32 to vector<64x512xf32>
    %14 = arith.maximumf %12, %13 : vector<64x512xf32>
    %c0_12 = arith.constant 0 : index
    %c0_13 = arith.constant 0 : index
    %15 = vector.load %arg6[%c0_12, %c0_13] : memref<64x1xf32, #tpu.memory_space<vmem>>, vector<64x1xf32>
    %16 = vector.broadcast %15 : vector<64x1xf32> to vector<64x512xf32>
    %17 = arith.mulf %14, %16 : vector<64x512xf32>
    %cst_14 = arith.constant dense<0.000000e+00> : vector<512xf32>
    %18 = vector.multi_reduction <add>, %17, %cst_14 [0] : vector<64x512xf32> to vector<512xf32>
    %19 = vector.shape_cast %18 : vector<512xf32> to vector<1x512xf32>
    %c0_15 = arith.constant 0 : index
    %c0_16 = arith.constant 0 : index
    %20 = vector.load %arg7[%c0_15, %c0_16] : memref<1x1xf32, #tpu.memory_space<vmem>>, vector<1x1xf32>
    %21 = vector.broadcast %20 : vector<1x1xf32> to vector<1x512xf32>
    %22 = arith.addf %19, %21 : vector<1x512xf32>
    %c0_17 = arith.constant 0 : index
    %c0_18 = arith.constant 0 : index
    %23 = vector.load %arg8[%c0_17, %c0_18] : memref<1x512xf32, #tpu.memory_space<vmem>>, vector<1x512xf32>
    tpu.vector_store %arg8[%c0_17, %c0_18], %22 {strides = array<i32>} : memref<1x512xf32, #tpu.memory_space<vmem>>, vector<1x512xf32>,
    return
  }
  func.func @transform_0(%arg0: i32) -> (i32, i32) {
    %c0_i32 = arith.constant 0 : i32
    %c0_i32_0 = arith.constant 0 : i32
    return %c0_i32, %arg0 : i32, i32
  }
  func.func @transform_1(%arg0: i32) -> (i32, i32) {
    %c0_i32 = arith.constant 0 : i32
    %c0_i32_0 = arith.constant 0 : i32
    %c0_i32_1 = arith.constant 0 : i32
    return %c0_i32, %c0_i32_0 : i32, i32
  }
  func.func @transform_2(%arg0: i32) -> (i32, i32) {
    %c0_i32 = arith.constant 0 : i32
    %c0_i32_0 = arith.constant 0 : i32
    %c0_i32_1 = arith.constant 0 : i32
    return %c0_i32, %c0_i32_0 : i32, i32
  }
  func.func @transform_3(%arg0: i32) -> (i32, i32) {
    %c0_i32 = arith.constant 0 : i32
    %c0_i32_0 = arith.constant 0 : i32
    %c0_i32_1 = arith.constant 0 : i32
    return %c0_i32, %c0_i32_0 : i32, i32
  }
  func.func @transform_4(%arg0: i32) -> (i32, i32) {
    %c0_i32 = arith.constant 0 : i32
    %c0_i32_0 = arith.constant 0 : i32
    %c0_i32_1 = arith.constant 0 : i32
    return %c0_i32, %c0_i32_0 : i32, i32
  }
  func.func @transform_5(%arg0: i32) -> (i32, i32) {
    %c0_i32 = arith.constant 0 : i32
    %c0_i32_0 = arith.constant 0 : i32
    %c0_i32_1 = arith.constant 0 : i32
    return %c0_i32, %c0_i32_0 : i32, i32
  }
  func.func @transform_6(%arg0: i32) -> (i32, i32) {
    %c0_i32 = arith.constant 0 : i32
    %c0_i32_0 = arith.constant 0 : i32
    %c0_i32_1 = arith.constant 0 : i32
    return %c0_i32, %c0_i32_0 : i32, i32
  }
  func.func @transform_7(%arg0: i32) -> (i32, i32) {
    %c0_i32 = arith.constant 0 : i32
    %c0_i32_0 = arith.constant 0 : i32
    return %c0_i32, %arg0 : i32, i32
  }
}

</mosaic_0001>

<llo_original>
// kernel: tpu_custom_call.1
$region0: #{tpu_custom_call.1}
  #allocation0 [shape = 'u32[]', space=smem, size = 0x4, offset = 0x4, fixed_abs, tag = 'smem constant byte address 0x4 - core index']
  #allocation1 [shape = 'u32[144,128]{1,0:T(1,128)}', space=vmem, size = 0x12000, scoped, tag = 'internal scratch']
  #allocation2 [shape = 'f32[1,1]{1,0:T(1,128)S(1)}', space=vmem, size = 0x200, scoped, tag = 'scoped memory for tpu_custom_call.1']
  %s0 = inlined_call_operand.hbm [shape: f32[896,1024], index: 0, kind: input, shape index: {}]
  %s1 = inlined_call_operand.hbm [shape: f32[64,896], index: 1, kind: input, shape index: {}]
  %s2 = inlined_call_operand.vmem [shape: f32[64,1], index: 2, kind: input, shape index: {}]
  %s3 = inlined_call_operand.hbm [shape: f32[64,64], index: 3, kind: input, shape index: {}]
  %s4 = inlined_call_operand.vmem [shape: f32[64,1], index: 4, kind: input, shape index: {}]
  %s5 = inlined_call_operand.vmem [shape: f32[64,1], index: 5, kind: input, shape index: {}]
  %s6 = inlined_call_operand.<no memory space> [shape: f32[1,1], index: 6, kind: input, shape index: {}]
  %s7 = inlined_call_operand.hbm [shape: f32[1,1024], index: 7, kind: output, shape index: {}]
  %s8 = sld [smem:[#allocation0]]
  $region73: #{tpu_custom_call.1} parent=0
    _
  %s10 = ssub.s32 1, %s8
  %s11 = scalar_select 0, %s10, %s8
  %v12 = vstv %s6
  %13 = vst [vmem:[#allocation2] sm:$0x1] %v12
  $region1: #{tpu_custom_call.1} parent=0
    #allocation3 [shape = 'u8[3670016]{0}', space=vmem, size = 0x380000, scoped, tag = 'input window, operand 0']
    #allocation4 [shape = 's32[2]{0}', space=sflag, size = 0x8, scoped, tag = 'scoped memory for tpu_custom_call.1']
    #allocation5 [shape = 's32[2]{0}', space=sflag, size = 0x8, scoped, tag = 'scoped memory for tpu_custom_call.1']
    #allocation6 [shape = 'u8[229376]{0}', space=vmem, size = 0x38000, scoped, tag = 'input window, operand 1, single buffered']
    #allocation7 [shape = 's32[1]{0}', space=sflag, size = 0x4, scoped, tag = 'scoped memory for tpu_custom_call.1']
    #allocation8 [shape = 'u8[32768]{0}', space=vmem, size = 0x8000, scoped, tag = 'input window, operand 3, single buffered']
    #allocation9 [shape = 'u8[4096]{0}', space=vmem, size = 0x1000, scoped, tag = 'output window, operand 0']
    %14 = vsyncpa [#allocation4], 0
    %s15 = scalar_lea.sflag [#allocation4], 1
    %16 = vsyncpa %s15, 0
    %17 = vsyncpa [#allocation7], 0
    %18 = vsyncpa [#allocation5], 0
    %s19 = scalar_lea.sflag [#allocation5], 1
    %20 = vsyncpa %s19, 0
    loop: start=0, step=1, limit=4
    $region2: #{tpu_custom_call.1} parent=1 // loop_pre_header
      _
    $region3: #{tpu_custom_call.1} parent=1 // loop_header
      %s22 = sphi 0, %s26
      %p23 = scmp.ge.s32.totalorder %s22, 4
      %s32 = sphi 0, %s34
      %s35 = sphi 0, %s32
      %s36 = sphi 0, %s35
      %s52 = sphi 0, %s36
      %s56 = sphi 0, %s56
      %s58 = sphi 0, %s56
      %s59 = sphi 0, %s58
      %s73 = sphi 0, %s59
      %s77 = sphi 0, %s77
      %s79 = sphi 0, %s77
      %s80 = sphi 0, %s79
      %s94 = sphi 0, %s80
      %s98 = sphi 0, %s98
      %s100 = sphi 0, %s98
      %s101 = sphi 0, %s100
      %s115 = sphi 0, %s101
      %s119 = sphi 0, %s119
      %s121 = sphi 0, %s119
      %s122 = sphi 0, %s121
      %s136 = sphi 0, %s122
      %s140 = sphi 0, %s140
      %s142 = sphi 0, %s140
      %s143 = sphi 0, %s142
      %s157 = sphi 0, %s143
      %s161 = sphi 0, %s161
      %s163 = sphi 0, %s161
      %s164 = sphi 0, %s163
      %s178 = sphi 0, %s164
      %s184 = sphi 0, %s186
      %s187 = sphi 0, %s184
      %s188 = sphi 0, %s187
      %s204 = sphi 0, %s188
    $region4: #{tpu_custom_call.1} parent=1 // loop_header_branch
      %25 = sbr.rel (%p23) target = $region8
    $region5: #{tpu_custom_call.1} parent=1 // loop_body
      %s27 = ssub.s32 %s22, 1
      %s28 = ssub.s32 %s22, 2
      %s29 = sadd.s32 %s22, 1
      %s30 = ssub.s32 %s22, %s29
      %p31 = scmp.eq.s32.totalorder %s30, 0
      %s33 = sadd.s32 %s32, 1
      %s34 = scalar_select %p31, %s32, %s33
      %p37 = pneg %p31
      %p38 = scmp.eq.s32.totalorder %s22, 1
      %p39 = por %p37, %p38
      %p40 = scmp.ne.s32.totalorder %s32, %s35
      %p41 = scmp.eq.s32.totalorder %s22, 0
      %p42 = por %p40, %p41
      %p43 = scmp.ne.s32.totalorder %s32, %s35
      %p44 = scmp.eq.s32.totalorder %s27, 1
      %p45 = por %p43, %p44
      %p46 = scmp.ne.s32.totalorder %s35, %s36
      %p47 = scmp.eq.s32.totalorder %s27, 0
      %p48 = por %p46, %p47
      %p49 = scmp.ne.s32.totalorder %s35, %s36
      %p50 = scmp.eq.s32.totalorder %s28, 1
      %p51 = por %p49, %p50
      %p53 = scmp.ne.s32.totalorder %s36, %s52
      %p54 = scmp.eq.s32.totalorder %s28, 0
      %p55 = por %p53, %p54
      %s57 = sadd.s32 %s56, 1
      %p60 = scmp.eq.s32.totalorder %s22, 1
      %p61 = scmp.ne.s32.totalorder %s56, %s58
      %p62 = scmp.eq.s32.totalorder %s22, 0
      %p63 = por %p61, %p62
      %p64 = scmp.ne.s32.totalorder %s56, %s58
      %p65 = scmp.eq.s32.totalorder %s27, 1
      %p66 = por %p64, %p65
      %p67 = scmp.ne.s32.totalorder %s58, %s59
      %p68 = scmp.eq.s32.totalorder %s27, 0
      %p69 = por %p67, %p68
      %p70 = scmp.ne.s32.totalorder %s58, %s59
      %p71 = scmp.eq.s32.totalorder %s28, 1
      %p72 = por %p70, %p71
      %p74 = scmp.ne.s32.totalorder %s59, %s73
      %p75 = scmp.eq.s32.totalorder %s28, 0
      %p76 = por %p74, %p75
      %s78 = sadd.s32 %s77, 1
      %p81 = scmp.eq.s32.totalorder %s22, 1
      %p82 = scmp.ne.s32.totalorder %s77, %s79
      %p83 = scmp.eq.s32.totalorder %s22, 0
      %p84 = por %p82, %p83
      %p85 = scmp.ne.s32.totalorder %s77, %s79
      %p86 = scmp.eq.s32.totalorder %s27, 1
      %p87 = por %p85, %p86
      %p88 = scmp.ne.s32.totalorder %s79, %s80
      %p89 = scmp.eq.s32.totalorder %s27, 0
      %p90 = por %p88, %p89
      %p91 = scmp.ne.s32.totalorder %s79, %s80
      %p92 = scmp.eq.s32.totalorder %s28, 1
      %p93 = por %p91, %p92
      %p95 = scmp.ne.s32.totalorder %s80, %s94
      %p96 = scmp.eq.s32.totalorder %s28, 0
      %p97 = por %p95, %p96
      %s99 = sadd.s32 %s98, 1
      %p102 = scmp.eq.s32.totalorder %s22, 1
      %p103 = scmp.ne.s32.totalorder %s98, %s100
      %p104 = scmp.eq.s32.totalorder %s22, 0
      %p105 = por %p103, %p104
      %p106 = scmp.ne.s32.totalorder %s98, %s100
      %p107 = scmp.eq.s32.totalorder %s27, 1
      %p108 = por %p106, %p107
      %p109 = scmp.ne.s32.totalorder %s100, %s101
      %p110 = scmp.eq.s32.totalorder %s27, 0
      %p111 = por %p109, %p110
      %p112 = scmp.ne.s32.totalorder %s100, %s101
      %p113 = scmp.eq.s32.totalorder %s28, 1
      %p114 = por %p112, %p113
      %p116 = scmp.ne.s32.totalorder %s101, %s115
      %p117 = scmp.eq.s32.totalorder %s28, 0
      %p118 = por %p116, %p117
      %s120 = sadd.s32 %s119, 1
      %p123 = scmp.eq.s32.totalorder %s22, 1
      %p124 = scmp.ne.s32.totalorder %s119, %s121
      %p125 = scmp.eq.s32.totalorder %s22, 0
      %p126 = por %p124, %p125
      %p127 = scmp.ne.s32.totalorder %s119, %s121
      %p128 = scmp.eq.s32.totalorder %s27, 1
      %p129 = por %p127, %p128
      %p130 = scmp.ne.s32.totalorder %s121, %s122
      %p131 = scmp.eq.s32.totalorder %s27, 0
      %p132 = por %p130, %p131
      %p133 = scmp.ne.s32.totalorder %s121, %s122
      %p134 = scmp.eq.s32.totalorder %s28, 1
      %p135 = por %p133, %p134
      %p137 = scmp.ne.s32.totalorder %s122, %s136
      %p138 = scmp.eq.s32.totalorder %s28, 0
      %p139 = por %p137, %p138
      %s141 = sadd.s32 %s140, 1
      %p144 = scmp.eq.s32.totalorder %s22, 1
      %p145 = scmp.ne.s32.totalorder %s140, %s142
      %p146 = scmp.eq.s32.totalorder %s22, 0
      %p147 = por %p145, %p146
      %p148 = scmp.ne.s32.totalorder %s140, %s142
      %p149 = scmp.eq.s32.totalorder %s27, 1
      %p150 = por %p148, %p149
      %p151 = scmp.ne.s32.totalorder %s142, %s143
      %p152 = scmp.eq.s32.totalorder %s27, 0
      %p153 = por %p151, %p152
      %p154 = scmp.ne.s32.totalorder %s142, %s143
      %p155 = scmp.eq.s32.totalorder %s28, 1
      %p156 = por %p154, %p155
      %p158 = scmp.ne.s32.totalorder %s143, %s157
      %p159 = scmp.eq.s32.totalorder %s28, 0
      %p160 = por %p158, %p159
      %s162 = sadd.s32 %s161, 1
      %p165 = scmp.eq.s32.totalorder %s22, 1
      %p166 = scmp.ne.s32.totalorder %s161, %s163
      %p167 = scmp.eq.s32.totalorder %s22, 0
      %p168 = por %p166, %p167
      %p169 = scmp.ne.s32.totalorder %s161, %s163
      %p170 = scmp.eq.s32.totalorder %s27, 1
      %p171 = por %p169, %p170
      %p172 = scmp.ne.s32.totalorder %s163, %s164
      %p173 = scmp.eq.s32.totalorder %s27, 0
      %p174 = por %p172, %p173
      %p175 = scmp.ne.s32.totalorder %s163, %s164
      %p176 = scmp.eq.s32.totalorder %s28, 1
      %p177 = por %p175, %p176
      %p179 = scmp.ne.s32.totalorder %s164, %s178
      %p180 = scmp.eq.s32.totalorder %s28, 0
      %p181 = por %p179, %p180
      %s182 = ssub.s32 %s22, %s29
      %p183 = scmp.eq.s32.totalorder %s182, 0
      %s185 = sadd.s32 %s184, 1
      %s186 = scalar_select %p183, %s184, %s185
      %p189 = pneg %p183
      %p190 = scmp.eq.s32.totalorder %s22, 1
      %p191 = por %p189, %p190
      %p192 = scmp.ne.s32.totalorder %s184, %s187
      %p193 = scmp.eq.s32.totalorder %s22, 0
      %p194 = por %p192, %p193
      %p195 = scmp.ne.s32.totalorder %s184, %s187
      %p196 = scmp.eq.s32.totalorder %s27, 1
      %p197 = por %p195, %p196
      %p198 = scmp.ne.s32.totalorder %s187, %s188
      %p199 = scmp.eq.s32.totalorder %s27, 0
      %p200 = por %p198, %p199
      %p201 = scmp.ne.s32.totalorder %s187, %s188
      %p202 = scmp.eq.s32.totalorder %s28, 1
      %p203 = por %p201, %p202
      %p205 = scmp.ne.s32.totalorder %s188, %s204
      %p206 = scmp.eq.s32.totalorder %s28, 0
      %p207 = por %p205, %p206
      %p208 = scmp.le.s32.totalorder 1, %s22
      %p209 = scmp.lt.s32.totalorder %s22, 3
      %p210 = pnand %p208, %p209
      %p211 = pneg %p210
      // Predicated region
      $region9: #{tpu_custom_call.1} parent=5 // pred_check
        _
      $region10: #{tpu_custom_call.1} parent=5 // pred_check_branch
        %213 = sbr.rel (%p210) target = $region12
      $region11: #{tpu_custom_call.1} parent=5 // pred_region
        %s214 = ssub.s32 %s22, 1
        // Predicated region
        $region13: #{tpu_custom_call.1} parent=11 // pred_check
          %p215 = pneg %p69
        $region14: #{tpu_custom_call.1} parent=11 // pred_check_branch
          %217 = sbr.rel (%p215) target = $region16
        $region15: #{tpu_custom_call.1} parent=11 // pred_region
          %s219 = ssub.s32 7168, 7168
          %220 = vsyncadd [#allocation7], %s219
          %s221 = sshll.u32 [#allocation6], 4
          %s222 = int_to_ptr.vmem [resolvable:$true] %s221
          %227 = dma.hbm_to_vmem [thread:$0]  %s1, 7168, %s222, [#allocation7], 896, 896, 56
        $region16: #{tpu_custom_call.1} parent=11 // pred_fallthru
          _
        // Predicated region
        $region17: #{tpu_custom_call.1} parent=11 // pred_check
          %p228 = pneg %p90
        $region18: #{tpu_custom_call.1} parent=11 // pred_check_branch
          %230 = sbr.rel (%p228) target = $region20
        $region19: #{tpu_custom_call.1} parent=11 // pred_region
          _
        $region20: #{tpu_custom_call.1} parent=11 // pred_fallthru
          _
        // Predicated region
        $region21: #{tpu_custom_call.1} parent=11 // pred_check
          %p231 = pneg %p111
        $region22: #{tpu_custom_call.1} parent=11 // pred_check_branch
          %233 = sbr.rel (%p231) target = $region24
        $region23: #{tpu_custom_call.1} parent=11 // pred_region
          %s235 = ssub.s32 1024, 1024
          %236 = vsyncadd [#allocation7], %s235
          %s237 = sshll.u32 [#allocation8], 4
          %s238 = int_to_ptr.vmem [resolvable:$true] %s237
          %243 = dma.hbm_to_vmem [thread:$0]  %s3, 1024, %s238, [#allocation7], 128, 128, 8
        $region24: #{tpu_custom_call.1} parent=11 // pred_fallthru
          _
        // Predicated region
        $region25: #{tpu_custom_call.1} parent=11 // pred_check
          %p244 = pneg %p132
        $region26: #{tpu_custom_call.1} parent=11 // pred_check_branch
          %246 = sbr.rel (%p244) target = $region28
        $region27: #{tpu_custom_call.1} parent=11 // pred_region
          _
        $region28: #{tpu_custom_call.1} parent=11 // pred_fallthru
          _
        // Predicated region
        $region29: #{tpu_custom_call.1} parent=11 // pred_check
          %p247 = pneg %p153
        $region30: #{tpu_custom_call.1} parent=11 // pred_check_branch
          %249 = sbr.rel (%p247) target = $region32
        $region31: #{tpu_custom_call.1} parent=11 // pred_region
          _
        $region32: #{tpu_custom_call.1} parent=11 // pred_fallthru
          _
        // Predicated region
        $region33: #{tpu_custom_call.1} parent=11 // pred_check
          %p250 = pneg %p174
        $region34: #{tpu_custom_call.1} parent=11 // pred_check_branch
          %252 = sbr.rel (%p250) target = $region36
        $region35: #{tpu_custom_call.1} parent=11 // pred_region
          _
        $region36: #{tpu_custom_call.1} parent=11 // pred_fallthru
          _
      $region12: #{tpu_custom_call.1} parent=5 // pred_fallthru
        _
      %p253 = scmp.lt.s32.totalorder %s22, 2
      // Predicated region
      $region37: #{tpu_custom_call.1} parent=5 // pred_check
        %p254 = pneg %p253
      $region38: #{tpu_custom_call.1} parent=5 // pred_check_branch
        %256 = sbr.rel (%p254) target = $region40
      $region39: #{tpu_custom_call.1} parent=5 // pred_region
        // Predicated region
        $region41: #{tpu_custom_call.1} parent=39 // pred_check
          %p257 = pneg %p42
        $region42: #{tpu_custom_call.1} parent=39 // pred_check_branch
          %259 = sbr.rel (%p257) target = $region44
        $region43: #{tpu_custom_call.1} parent=39 // pred_region
          %s260 = sand.u32 %s32, 1
          %s261 = scalar_lea.sflag [#allocation4], %s260
          %s262 = sand.u32 %s32, 1
          %s263 = smul.addr %s262, 3584
          %s264 = scalar_lea.vmem [#allocation3], %s263
          %s265 = smul.u32 4, %s22
          %s267 = ssub.s32 57344, 57344
          %268 = vsyncadd %s261, %s267
          %s269 = smul.addr %s265, 128
          %s270 = scalar_lea.hbm %s0, %s269
          %s271 = sshll.u32 %s264, 4
          %s272 = int_to_ptr.vmem [resolvable:$true] %s271
          %277 = dma.hbm_to_vmem [thread:$0]  %s270, 57344, %s272, %s261, 1024, 512, 32
        $region44: #{tpu_custom_call.1} parent=39 // pred_fallthru
          _
      $region40: #{tpu_custom_call.1} parent=5 // pred_fallthru
        _
      %p278 = scmp.le.s32.totalorder 1, %s22
      %p279 = scmp.lt.s32.totalorder %s22, 3
      %p280 = pnand %p278, %p279
      %p281 = pneg %p280
      // Predicated region
      $region45: #{tpu_custom_call.1} parent=5 // pred_check
        _
      $region46: #{tpu_custom_call.1} parent=5 // pred_check_branch
        %283 = sbr.rel (%p280) target = $region48
      $region47: #{tpu_custom_call.1} parent=5 // pred_region
        %s284 = ssub.s32 %s22, 1
        %s285 = sand.u32 %s35, 1
        %s286 = scalar_lea.sflag [#allocation4], %s285
        %s287 = sand.u32 %s35, 1
        %s288 = smul.addr %s287, 3584
        %s289 = scalar_lea.vmem [#allocation3], %s288
        // Predicated region
        $region49: #{tpu_custom_call.1} parent=47 // pred_check
          %p290 = pneg %p48
        $region50: #{tpu_custom_call.1} parent=47 // pred_check_branch
          %292 = sbr.rel (%p290) target = $region52
        $region51: #{tpu_custom_call.1} parent=47 // pred_region
          %293 = dma.done %s286, 57344
        $region52: #{tpu_custom_call.1} parent=47 // pred_fallthru
          _
        // Predicated region
        $region53: #{tpu_custom_call.1} parent=47 // pred_check
          %p294 = pneg %p69
        $region54: #{tpu_custom_call.1} parent=47 // pred_check_branch
          %296 = sbr.rel (%p294) target = $region56
        $region55: #{tpu_custom_call.1} parent=47 // pred_region
          %297 = dma.done [#allocation7], 7168
        $region56: #{tpu_custom_call.1} parent=47 // pred_fallthru
          _
        // Predicated region
        $region57: #{tpu_custom_call.1} parent=47 // pred_check
          %p298 = pneg %p111
        $region58: #{tpu_custom_call.1} parent=47 // pred_check_branch
          %300 = sbr.rel (%p298) target = $region60
        $region59: #{tpu_custom_call.1} parent=47 // pred_region
          %301 = dma.done [#allocation7], 1024
        $region60: #{tpu_custom_call.1} parent=47 // pred_fallthru
          _
        %s302 = sand.u32 %s35, 1
        %s303 = scalar_lea.sflag [#allocation4], %s302
        %s304 = sand.u32 %s35, 1
        %s305 = smul.addr %s304, 3584
        %s306 = scalar_lea.vmem [#allocation3], %s305
        %p307 = pneg %p48
        %p308 = pneg %p45
        %p309 = pneg %p69
        %p310 = pneg %p66
        %p311 = pneg %p90
        %p312 = pneg %p87
        %p313 = pneg %p111
        %p314 = pneg %p108
        %p315 = pneg %p132
        %p316 = pneg %p129
        %p317 = pneg %p153
        %p318 = pneg %p150
        %p319 = pneg %p174
        %p320 = pneg %p171
        %p321 = pneg %p200
        %p322 = pneg %p197
        %s323 = sand.u32 %s187, 1
        %s324 = scalar_lea.sflag [#allocation5], %s323
        %s325 = sand.u32 %s187, 1
        %s326 = smul.addr %s325, 4
        %s327 = scalar_lea.vmem [#allocation9], %s326
        %s328 = smul.u32 4, %s27
        %s329 = smul.u32 4, %s27
        %v330 = vld [vmem:[#allocation6] sm:$0xff]
        %v331 = vld [vmem:[#allocation6 + $0x8] sm:$0xff]
        %v332 = vld [vmem:[#allocation6 + $0x10] sm:$0xff]
        %v333 = vld [vmem:[#allocation6 + $0x18] sm:$0xff]
        %v334 = vld [vmem:[#allocation6 + $0x20] sm:$0xff]
        %v335 = vld [vmem:[#allocation6 + $0x28] sm:$0xff]
        %v336 = vld [vmem:[#allocation6 + $0x30] sm:$0xff]
        %v337 = vld [vmem:[#allocation6 + $0x38] sm:$0xff]
        %v338 = vld [vmem:[#allocation6 + $0x40] sm:$0xff]
        %v339 = vld [vmem:[#allocation6 + $0x48] sm:$0xff]
        %v340 = vld [vmem:[#allocation6 + $0x50] sm:$0xff]
        %v341 = vld [vmem:[#allocation6 + $0x58] sm:$0xff]
        %v342 = vld [vmem:[#allocation6 + $0x60] sm:$0xff]
        %v343 = vld [vmem:[#allocation6 + $0x68] sm:$0xff]
        %v344 = vld [vmem:[#allocation6 + $0x70] sm:$0xff]
        %v345 = vld [vmem:[#allocation6 + $0x78] sm:$0xff]
        %v346 = vld [vmem:[#allocation6 + $0x80] sm:$0xff]
        %v347 = vld [vmem:[#allocation6 + $0x88] sm:$0xff]
        %v348 = vld [vmem:[#allocation6 + $0x90] sm:$0xff]
        %v349 = vld [vmem:[#allocation6 + $0x98] sm:$0xff]
        %v350 = vld [vmem:[#allocation6 + $0xa0] sm:$0xff]
        %v351 = vld [vmem:[#allocation6 + $0xa8] sm:$0xff]
        %v352 = vld [vmem:[#allocation6 + $0xb0] sm:$0xff]
        %v353 = vld [vmem:[#allocation6 + $0xb8] sm:$0xff]
        %v354 = vld [vmem:[#allocation6 + $0xc0] sm:$0xff]
        %v355 = vld [vmem:[#allocation6 + $0xc8] sm:$0xff]
        %v356 = vld [vmem:[#allocation6 + $0xd0] sm:$0xff]
        %v357 = vld [vmem:[#allocation6 + $0xd8] sm:$0xff]
        %v358 = vld [vmem:[#allocation6 + $0xe0] sm:$0xff]
        %v359 = vld [vmem:[#allocation6 + $0xe8] sm:$0xff]
        %v360 = vld [vmem:[#allocation6 + $0xf0] sm:$0xff]
        %v361 = vld [vmem:[#allocation6 + $0xf8] sm:$0xff]
        %v362 = vld [vmem:[#allocation6 + $0x100] sm:$0xff]
        %v363 = vld [vmem:[#allocation6 + $0x108] sm:$0xff]
        %v364 = vld [vmem:[#allocation6 + $0x110] sm:$0xff]
        %v365 = vld [vmem:[#allocation6 + $0x118] sm:$0xff]
        %v366 = vld [vmem:[#allocation6 + $0x120] sm:$0xff]
        %v367 = vld [vmem:[#allocation6 + $0x128] sm:$0xff]
        %v368 = vld [vmem:[#allocation6 + $0x130] sm:$0xff]
        %v369 = vld [vmem:[#allocation6 + $0x138] sm:$0xff]
        %v370 = vld [vmem:[#allocation6 + $0x140] sm:$0xff]
        %v371 = vld [vmem:[#allocation6 + $0x148] sm:$0xff]
        %v372 = vld [vmem:[#allocation6 + $0x150] sm:$0xff]
        %v373 = vld [vmem:[#allocation6 + $0x158] sm:$0xff]
        %v374 = vld [vmem:[#allocation6 + $0x160] sm:$0xff]
        %v375 = vld [vmem:[#allocation6 + $0x168] sm:$0xff]
        %v376 = vld [vmem:[#allocation6 + $0x170] sm:$0xff]
        %v377 = vld [vmem:[#allocation6 + $0x178] sm:$0xff]
        %v378 = vld [vmem:[#allocation6 + $0x180] sm:$0xff]
        %v379 = vld [vmem:[#allocation6 + $0x188] sm:$0xff]
        %v380 = vld [vmem:[#allocation6 + $0x190] sm:$0xff]
        %v381 = vld [vmem:[#allocation6 + $0x198] sm:$0xff]
        %v382 = vld [vmem:[#allocation6 + $0x1a0] sm:$0xff]
        %v383 = vld [vmem:[#allocation6 + $0x1a8] sm:$0xff]
        %v384 = vld [vmem:[#allocation6 + $0x1b0] sm:$0xff]
        %v385 = vld [vmem:[#allocation6 + $0x1b8] sm:$0xff]
        %v386 = vld [vmem:[%s289] sm:$0xff]
        %v387 = vld [vmem:[%s289 + $0x8] sm:$0xff]
        %v388 = vld [vmem:[%s289 + $0x10] sm:$0xff]
        %v389 = vld [vmem:[%s289 + $0x18] sm:$0xff]
        %v390 = vld [vmem:[%s289 + $0x20] sm:$0xff]
        %v391 = vld [vmem:[%s289 + $0x28] sm:$0xff]
        %v392 = vld [vmem:[%s289 + $0x30] sm:$0xff]
        %v393 = vld [vmem:[%s289 + $0x38] sm:$0xff]
        %v394 = vld [vmem:[%s289 + $0x40] sm:$0xff]
        %v395 = vld [vmem:[%s289 + $0x48] sm:$0xff]
        %v396 = vld [vmem:[%s289 + $0x50] sm:$0xff]
        %v397 = vld [vmem:[%s289 + $0x58] sm:$0xff]
        %v398 = vld [vmem:[%s289 + $0x60] sm:$0xff]
        %v399 = vld [vmem:[%s289 + $0x68] sm:$0xff]
        %v400 = vld [vmem:[%s289 + $0x70] sm:$0xff]
        %v401 = vld [vmem:[%s289 + $0x78] sm:$0xff]
        %v402 = vld [vmem:[%s289 + $0x80] sm:$0xff]
        %v403 = vld [vmem:[%s289 + $0x88] sm:$0xff]
        %v404 = vld [vmem:[%s289 + $0x90] sm:$0xff]
        %v405 = vld [vmem:[%s289 + $0x98] sm:$0xff]
        %v406 = vld [vmem:[%s289 + $0xa0] sm:$0xff]
        %v407 = vld [vmem:[%s289 + $0xa8] sm:$0xff]
        %v408 = vld [vmem:[%s289 + $0xb0] sm:$0xff]
        %v409 = vld [vmem:[%s289 + $0xb8] sm:$0xff]
        %v410 = vld [vmem:[%s289 + $0xc0] sm:$0xff]
        %v411 = vld [vmem:[%s289 + $0xc8] sm:$0xff]
        %v412 = vld [vmem:[%s289 + $0xd0] sm:$0xff]
        %v413 = vld [vmem:[%s289 + $0xd8] sm:$0xff]
        %v414 = vld [vmem:[%s289 + $0xe0] sm:$0xff]
        %v415 = vld [vmem:[%s289 + $0xe8] sm:$0xff]
        %v416 = vld [vmem:[%s289 + $0xf0] sm:$0xff]
        %v417 = vld [vmem:[%s289 + $0xf8] sm:$0xff]
        %v418 = vld [vmem:[%s289 + $0x100] sm:$0xff]
        %v419 = vld [vmem:[%s289 + $0x108] sm:$0xff]
        %v420 = vld [vmem:[%s289 + $0x110] sm:$0xff]
        %v421 = vld [vmem:[%s289 + $0x118] sm:$0xff]
        %v422 = vld [vmem:[%s289 + $0x120] sm:$0xff]
        %v423 = vld [vmem:[%s289 + $0x128] sm:$0xff]
        %v424 = vld [vmem:[%s289 + $0x130] sm:$0xff]
        %v425 = vld [vmem:[%s289 + $0x138] sm:$0xff]
        %v426 = vld [vmem:[%s289 + $0x140] sm:$0xff]
        %v427 = vld [vmem:[%s289 + $0x148] sm:$0xff]
        %v428 = vld [vmem:[%s289 + $0x150] sm:$0xff]
        %v429 = vld [vmem:[%s289 + $0x158] sm:$0xff]
        %v430 = vld [vmem:[%s289 + $0x160] sm:$0xff]
        %v431 = vld [vmem:[%s289 + $0x168] sm:$0xff]
        %v432 = vld [vmem:[%s289 + $0x170] sm:$0xff]
        %v433 = vld [vmem:[%s289 + $0x178] sm:$0xff]
        %v434 = vld [vmem:[%s289 + $0x180] sm:$0xff]
        %v435 = vld [vmem:[%s289 + $0x188] sm:$0xff]
        %v436 = vld [vmem:[%s289 + $0x190] sm:$0xff]
        %v437 = vld [vmem:[%s289 + $0x198] sm:$0xff]
        %v438 = vld [vmem:[%s289 + $0x1a0] sm:$0xff]
        %v439 = vld [vmem:[%s289 + $0x1a8] sm:$0xff]
        %v440 = vld [vmem:[%s289 + $0x1b0] sm:$0xff]
        %v441 = vld [vmem:[%s289 + $0x1b8] sm:$0xff]
        %v442 = vld [vmem:[%s289 + $0x1c0] sm:$0xff]
        %v443 = vld [vmem:[%s289 + $0x1c8] sm:$0xff]
        %v444 = vld [vmem:[%s289 + $0x1d0] sm:$0xff]
        %v445 = vld [vmem:[%s289 + $0x1d8] sm:$0xff]
        %v446 = vld [vmem:[%s289 + $0x1e0] sm:$0xff]
        %v447 = vld [vmem:[%s289 + $0x1e8] sm:$0xff]
        %v448 = vld [vmem:[%s289 + $0x1f0] sm:$0xff]
        %v449 = vld [vmem:[%s289 + $0x1f8] sm:$0xff]
        %v450 = vld [vmem:[%s289 + $0x200] sm:$0xff]
        %v451 = vld [vmem:[%s289 + $0x208] sm:$0xff]
        %v452 = vld [vmem:[%s289 + $0x210] sm:$0xff]
        %v453 = vld [vmem:[%s289 + $0x218] sm:$0xff]
        %v454 = vld [vmem:[%s289 + $0x220] sm:$0xff]
        %v455 = vld [vmem:[%s289 + $0x228] sm:$0xff]
        %v456 = vld [vmem:[%s289 + $0x230] sm:$0xff]
        %v457 = vld [vmem:[%s289 + $0x238] sm:$0xff]
        %v458 = vld [vmem:[%s289 + $0x240] sm:$0xff]
        %v459 = vld [vmem:[%s289 + $0x248] sm:$0xff]
        %v460 = vld [vmem:[%s289 + $0x250] sm:$0xff]
        %v461 = vld [vmem:[%s289 + $0x258] sm:$0xff]
        %v462 = vld [vmem:[%s289 + $0x260] sm:$0xff]
        %v463 = vld [vmem:[%s289 + $0x268] sm:$0xff]
        %v464 = vld [vmem:[%s289 + $0x270] sm:$0xff]
        %v465 = vld [vmem:[%s289 + $0x278] sm:$0xff]
        %v466 = vld [vmem:[%s289 + $0x280] sm:$0xff]
        %v467 = vld [vmem:[%s289 + $0x288] sm:$0xff]
        %v468 = vld [vmem:[%s289 + $0x290] sm:$0xff]
        %v469 = vld [vmem:[%s289 + $0x298] sm:$0xff]
        %v470 = vld [vmem:[%s289 + $0x2a0] sm:$0xff]
        %v471 = vld [vmem:[%s289 + $0x2a8] sm:$0xff]
        %v472 = vld [vmem:[%s289 + $0x2b0] sm:$0xff]
        %v473 = vld [vmem:[%s289 + $0x2b8] sm:$0xff]
        %v474 = vld [vmem:[%s289 + $0x2c0] sm:$0xff]
        %v475 = vld [vmem:[%s289 + $0x2c8] sm:$0xff]
        %v476 = vld [vmem:[%s289 + $0x2d0] sm:$0xff]
        %v477 = vld [vmem:[%s289 + $0x2d8] sm:$0xff]
        %v478 = vld [vmem:[%s289 + $0x2e0] sm:$0xff]
        %v479 = vld [vmem:[%s289 + $0x2e8] sm:$0xff]
        %v480 = vld [vmem:[%s289 + $0x2f0] sm:$0xff]
        %v481 = vld [vmem:[%s289 + $0x2f8] sm:$0xff]
        %v482 = vld [vmem:[%s289 + $0x300] sm:$0xff]
        %v483 = vld [vmem:[%s289 + $0x308] sm:$0xff]
        %v484 = vld [vmem:[%s289 + $0x310] sm:$0xff]
        %v485 = vld [vmem:[%s289 + $0x318] sm:$0xff]
        %v486 = vld [vmem:[%s289 + $0x320] sm:$0xff]
        %v487 = vld [vmem:[%s289 + $0x328] sm:$0xff]
        %v488 = vld [vmem:[%s289 + $0x330] sm:$0xff]
        %v489 = vld [vmem:[%s289 + $0x338] sm:$0xff]
        %v490 = vld [vmem:[%s289 + $0x340] sm:$0xff]
        %v491 = vld [vmem:[%s289 + $0x348] sm:$0xff]
        %v492 = vld [vmem:[%s289 + $0x350] sm:$0xff]
        %v493 = vld [vmem:[%s289 + $0x358] sm:$0xff]
        %v494 = vld [vmem:[%s289 + $0x360] sm:$0xff]
        %v495 = vld [vmem:[%s289 + $0x368] sm:$0xff]
        %v496 = vld [vmem:[%s289 + $0x370] sm:$0xff]
        %v497 = vld [vmem:[%s289 + $0x378] sm:$0xff]
        %v498 = vld [vmem:[%s289 + $0x380] sm:$0xff]
        %v499 = vld [vmem:[%s289 + $0x388] sm:$0xff]
        %v500 = vld [vmem:[%s289 + $0x390] sm:$0xff]
        %v501 = vld [vmem:[%s289 + $0x398] sm:$0xff]
        %v502 = vld [vmem:[%s289 + $0x3a0] sm:$0xff]
        %v503 = vld [vmem:[%s289 + $0x3a8] sm:$0xff]
        %v504 = vld [vmem:[%s289 + $0x3b0] sm:$0xff]
        %v505 = vld [vmem:[%s289 + $0x3b8] sm:$0xff]
        %v506 = vld [vmem:[%s289 + $0x3c0] sm:$0xff]
        %v507 = vld [vmem:[%s289 + $0x3c8] sm:$0xff]
        %v508 = vld [vmem:[%s289 + $0x3d0] sm:$0xff]
        %v509 = vld [vmem:[%s289 + $0x3d8] sm:$0xff]
        %v510 = vld [vmem:[%s289 + $0x3e0] sm:$0xff]
        %v511 = vld [vmem:[%s289 + $0x3e8] sm:$0xff]
        %v512 = vld [vmem:[%s289 + $0x3f0] sm:$0xff]
        %v513 = vld [vmem:[%s289 + $0x3f8] sm:$0xff]
        %v514 = vld [vmem:[%s289 + $0x400] sm:$0xff]
        %v515 = vld [vmem:[%s289 + $0x408] sm:$0xff]
        %v516 = vld [vmem:[%s289 + $0x410] sm:$0xff]
        %v517 = vld [vmem:[%s289 + $0x418] sm:$0xff]
        %v518 = vld [vmem:[%s289 + $0x420] sm:$0xff]
        %v519 = vld [vmem:[%s289 + $0x428] sm:$0xff]
        %v520 = vld [vmem:[%s289 + $0x430] sm:$0xff]
        %v521 = vld [vmem:[%s289 + $0x438] sm:$0xff]
        %v522 = vld [vmem:[%s289 + $0x440] sm:$0xff]
        %v523 = vld [vmem:[%s289 + $0x448] sm:$0xff]
        %v524 = vld [vmem:[%s289 + $0x450] sm:$0xff]
        %v525 = vld [vmem:[%s289 + $0x458] sm:$0xff]
        %v526 = vld [vmem:[%s289 + $0x460] sm:$0xff]
        %v527 = vld [vmem:[%s289 + $0x468] sm:$0xff]
        %v528 = vld [vmem:[%s289 + $0x470] sm:$0xff]
        %v529 = vld [vmem:[%s289 + $0x478] sm:$0xff]
        %v530 = vld [vmem:[%s289 + $0x480] sm:$0xff]
        %v531 = vld [vmem:[%s289 + $0x488] sm:$0xff]
        %v532 = vld [vmem:[%s289 + $0x490] sm:$0xff]
        %v533 = vld [vmem:[%s289 + $0x498] sm:$0xff]
        %v534 = vld [vmem:[%s289 + $0x4a0] sm:$0xff]
        %v535 = vld [vmem:[%s289 + $0x4a8] sm:$0xff]
        %v536 = vld [vmem:[%s289 + $0x4b0] sm:$0xff]
        %v537 = vld [vmem:[%s289 + $0x4b8] sm:$0xff]
        %v538 = vld [vmem:[%s289 + $0x4c0] sm:$0xff]
        %v539 = vld [vmem:[%s289 + $0x4c8] sm:$0xff]
        %v540 = vld [vmem:[%s289 + $0x4d0] sm:$0xff]
        %v541 = vld [vmem:[%s289 + $0x4d8] sm:$0xff]
        %v542 = vld [vmem:[%s289 + $0x4e0] sm:$0xff]
        %v543 = vld [vmem:[%s289 + $0x4e8] sm:$0xff]
        %v544 = vld [vmem:[%s289 + $0x4f0] sm:$0xff]
        %v545 = vld [vmem:[%s289 + $0x4f8] sm:$0xff]
        %v546 = vld [vmem:[%s289 + $0x500] sm:$0xff]
        %v547 = vld [vmem:[%s289 + $0x508] sm:$0xff]
        %v548 = vld [vmem:[%s289 + $0x510] sm:$0xff]
        %v549 = vld [vmem:[%s289 + $0x518] sm:$0xff]
        %v550 = vld [vmem:[%s289 + $0x520] sm:$0xff]
        %v551 = vld [vmem:[%s289 + $0x528] sm:$0xff]
        %v552 = vld [vmem:[%s289 + $0x530] sm:$0xff]
        %v553 = vld [vmem:[%s289 + $0x538] sm:$0xff]
        %v554 = vld [vmem:[%s289 + $0x540] sm:$0xff]
        %v555 = vld [vmem:[%s289 + $0x548] sm:$0xff]
        %v556 = vld [vmem:[%s289 + $0x550] sm:$0xff]
        %v557 = vld [vmem:[%s289 + $0x558] sm:$0xff]
        %v558 = vld [vmem:[%s289 + $0x560] sm:$0xff]
        %v559 = vld [vmem:[%s289 + $0x568] sm:$0xff]
        %v560 = vld [vmem:[%s289 + $0x570] sm:$0xff]
        %v561 = vld [vmem:[%s289 + $0x578] sm:$0xff]
        %v562 = vld [vmem:[%s289 + $0x580] sm:$0xff]
        %v563 = vld [vmem:[%s289 + $0x588] sm:$0xff]
        %v564 = vld [vmem:[%s289 + $0x590] sm:$0xff]
        %v565 = vld [vmem:[%s289 + $0x598] sm:$0xff]
        %v566 = vld [vmem:[%s289 + $0x5a0] sm:$0xff]
        %v567 = vld [vmem:[%s289 + $0x5a8] sm:$0xff]
        %v568 = vld [vmem:[%s289 + $0x5b0] sm:$0xff]
        %v569 = vld [vmem:[%s289 + $0x5b8] sm:$0xff]
        %v570 = vld [vmem:[%s289 + $0x5c0] sm:$0xff]
        %v571 = vld [vmem:[%s289 + $0x5c8] sm:$0xff]
        %v572 = vld [vmem:[%s289 + $0x5d0] sm:$0xff]
        %v573 = vld [vmem:[%s289 + $0x5d8] sm:$0xff]
        %v574 = vld [vmem:[%s289 + $0x5e0] sm:$0xff]
        %v575 = vld [vmem:[%s289 + $0x5e8] sm:$0xff]
        %v576 = vld [vmem:[%s289 + $0x5f0] sm:$0xff]
        %v577 = vld [vmem:[%s289 + $0x5f8] sm:$0xff]
        %v578 = vld [vmem:[%s289 + $0x600] sm:$0xff]
        %v579 = vld [vmem:[%s289 + $0x608] sm:$0xff]
        %v580 = vld [vmem:[%s289 + $0x610] sm:$0xff]
        %v581 = vld [vmem:[%s289 + $0x618] sm:$0xff]
        %v582 = vld [vmem:[%s289 + $0x620] sm:$0xff]
        %v583 = vld [vmem:[%s289 + $0x628] sm:$0xff]
        %v584 = vld [vmem:[%s289 + $0x630] sm:$0xff]
        %v585 = vld [vmem:[%s289 + $0x638] sm:$0xff]
        %v586 = vld [vmem:[%s289 + $0x640] sm:$0xff]
        %v587 = vld [vmem:[%s289 + $0x648] sm:$0xff]
        %v588 = vld [vmem:[%s289 + $0x650] sm:$0xff]
        %v589 = vld [vmem:[%s289 + $0x658] sm:$0xff]
        %v590 = vld [vmem:[%s289 + $0x660] sm:$0xff]
        %v591 = vld [vmem:[%s289 + $0x668] sm:$0xff]
        %v592 = vld [vmem:[%s289 + $0x670] sm:$0xff]
        %v593 = vld [vmem:[%s289 + $0x678] sm:$0xff]
        %v594 = vld [vmem:[%s289 + $0x680] sm:$0xff]
        %v595 = vld [vmem:[%s289 + $0x688] sm:$0xff]
        %v596 = vld [vmem:[%s289 + $0x690] sm:$0xff]
        %v597 = vld [vmem:[%s289 + $0x698] sm:$0xff]
        %v598 = vld [vmem:[%s289 + $0x6a0] sm:$0xff]
        %v599 = vld [vmem:[%s289 + $0x6a8] sm:$0xff]
        %v600 = vld [vmem:[%s289 + $0x6b0] sm:$0xff]
        %v601 = vld [vmem:[%s289 + $0x6b8] sm:$0xff]
        %v602 = vld [vmem:[%s289 + $0x6c0] sm:$0xff]
        %v603 = vld [vmem:[%s289 + $0x6c8] sm:$0xff]
        %v604 = vld [vmem:[%s289 + $0x6d0] sm:$0xff]
        %v605 = vld [vmem:[%s289 + $0x6d8] sm:$0xff]
        %v606 = vld [vmem:[%s289 + $0x6e0] sm:$0xff]
        %v607 = vld [vmem:[%s289 + $0x6e8] sm:$0xff]
        %v608 = vld [vmem:[%s289 + $0x6f0] sm:$0xff]
        %v609 = vld [vmem:[%s289 + $0x6f8] sm:$0xff]
        %v610 = vld [vmem:[%s289 + $0x700] sm:$0xff]
        %v611 = vld [vmem:[%s289 + $0x708] sm:$0xff]
        %v612 = vld [vmem:[%s289 + $0x710] sm:$0xff]
        %v613 = vld [vmem:[%s289 + $0x718] sm:$0xff]
        %v614 = vld [vmem:[%s289 + $0x720] sm:$0xff]
        %v615 = vld [vmem:[%s289 + $0x728] sm:$0xff]
        %v616 = vld [vmem:[%s289 + $0x730] sm:$0xff]
        %v617 = vld [vmem:[%s289 + $0x738] sm:$0xff]
        %v618 = vld [vmem:[%s289 + $0x740] sm:$0xff]
        %v619 = vld [vmem:[%s289 + $0x748] sm:$0xff]
        %v620 = vld [vmem:[%s289 + $0x750] sm:$0xff]
        %v621 = vld [vmem:[%s289 + $0x758] sm:$0xff]
        %v622 = vld [vmem:[%s289 + $0x760] sm:$0xff]
        %v623 = vld [vmem:[%s289 + $0x768] sm:$0xff]
        %v624 = vld [vmem:[%s289 + $0x770] sm:$0xff]
        %v625 = vld [vmem:[%s289 + $0x778] sm:$0xff]
        %v626 = vld [vmem:[%s289 + $0x780] sm:$0xff]
        %v627 = vld [vmem:[%s289 + $0x788] sm:$0xff]
        %v628 = vld [vmem:[%s289 + $0x790] sm:$0xff]
        %v629 = vld [vmem:[%s289 + $0x798] sm:$0xff]
        %v630 = vld [vmem:[%s289 + $0x7a0] sm:$0xff]
        %v631 = vld [vmem:[%s289 + $0x7a8] sm:$0xff]
        %v632 = vld [vmem:[%s289 + $0x7b0] sm:$0xff]
        %v633 = vld [vmem:[%s289 + $0x7b8] sm:$0xff]
        %v634 = vld [vmem:[%s289 + $0x7c0] sm:$0xff]
        %v635 = vld [vmem:[%s289 + $0x7c8] sm:$0xff]
        %v636 = vld [vmem:[%s289 + $0x7d0] sm:$0xff]
        %v637 = vld [vmem:[%s289 + $0x7d8] sm:$0xff]
        %v638 = vld [vmem:[%s289 + $0x7e0] sm:$0xff]
        %v639 = vld [vmem:[%s289 + $0x7e8] sm:$0xff]
        %v640 = vld [vmem:[%s289 + $0x7f0] sm:$0xff]
        %v641 = vld [vmem:[%s289 + $0x7f8] sm:$0xff]
        %v642 = vld [vmem:[%s289 + $0x800] sm:$0xff]
        %v643 = vld [vmem:[%s289 + $0x808] sm:$0xff]
        %v644 = vld [vmem:[%s289 + $0x810] sm:$0xff]
        %v645 = vld [vmem:[%s289 + $0x818] sm:$0xff]
        %v646 = vld [vmem:[%s289 + $0x820] sm:$0xff]
        %v647 = vld [vmem:[%s289 + $0x828] sm:$0xff]
        %v648 = vld [vmem:[%s289 + $0x830] sm:$0xff]
        %v649 = vld [vmem:[%s289 + $0x838] sm:$0xff]
        %v650 = vld [vmem:[%s289 + $0x840] sm:$0xff]
        %v651 = vld [vmem:[%s289 + $0x848] sm:$0xff]
        %v652 = vld [vmem:[%s289 + $0x850] sm:$0xff]
        %v653 = vld [vmem:[%s289 + $0x858] sm:$0xff]
        %v654 = vld [vmem:[%s289 + $0x860] sm:$0xff]
        %v655 = vld [vmem:[%s289 + $0x868] sm:$0xff]
        %v656 = vld [vmem:[%s289 + $0x870] sm:$0xff]
        %v657 = vld [vmem:[%s289 + $0x878] sm:$0xff]
        %v658 = vld [vmem:[%s289 + $0x880] sm:$0xff]
        %v659 = vld [vmem:[%s289 + $0x888] sm:$0xff]
        %v660 = vld [vmem:[%s289 + $0x890] sm:$0xff]
        %v661 = vld [vmem:[%s289 + $0x898] sm:$0xff]
        %v662 = vld [vmem:[%s289 + $0x8a0] sm:$0xff]
        %v663 = vld [vmem:[%s289 + $0x8a8] sm:$0xff]
        %v664 = vld [vmem:[%s289 + $0x8b0] sm:$0xff]
        %v665 = vld [vmem:[%s289 + $0x8b8] sm:$0xff]
        %v666 = vld [vmem:[%s289 + $0x8c0] sm:$0xff]
        %v667 = vld [vmem:[%s289 + $0x8c8] sm:$0xff]
        %v668 = vld [vmem:[%s289 + $0x8d0] sm:$0xff]
        %v669 = vld [vmem:[%s289 + $0x8d8] sm:$0xff]
        %v670 = vld [vmem:[%s289 + $0x8e0] sm:$0xff]
        %v671 = vld [vmem:[%s289 + $0x8e8] sm:$0xff]
        %v672 = vld [vmem:[%s289 + $0x8f0] sm:$0xff]
        %v673 = vld [vmem:[%s289 + $0x8f8] sm:$0xff]
        %v674 = vld [vmem:[%s289 + $0x900] sm:$0xff]
        %v675 = vld [vmem:[%s289 + $0x908] sm:$0xff]
        %v676 = vld [vmem:[%s289 + $0x910] sm:$0xff]
        %v677 = vld [vmem:[%s289 + $0x918] sm:$0xff]
        %v678 = vld [vmem:[%s289 + $0x920] sm:$0xff]
        %v679 = vld [vmem:[%s289 + $0x928] sm:$0xff]
        %v680 = vld [vmem:[%s289 + $0x930] sm:$0xff]
        %v681 = vld [vmem:[%s289 + $0x938] sm:$0xff]
        %v682 = vld [vmem:[%s289 + $0x940] sm:$0xff]
        %v683 = vld [vmem:[%s289 + $0x948] sm:$0xff]
        %v684 = vld [vmem:[%s289 + $0x950] sm:$0xff]
        %v685 = vld [vmem:[%s289 + $0x958] sm:$0xff]
        %v686 = vld [vmem:[%s289 + $0x960] sm:$0xff]
        %v687 = vld [vmem:[%s289 + $0x968] sm:$0xff]
        %v688 = vld [vmem:[%s289 + $0x970] sm:$0xff]
        %v689 = vld [vmem:[%s289 + $0x978] sm:$0xff]
        %v690 = vld [vmem:[%s289 + $0x980] sm:$0xff]
        %v691 = vld [vmem:[%s289 + $0x988] sm:$0xff]
        %v692 = vld [vmem:[%s289 + $0x990] sm:$0xff]
        %v693 = vld [vmem:[%s289 + $0x998] sm:$0xff]
        %v694 = vld [vmem:[%s289 + $0x9a0] sm:$0xff]
        %v695 = vld [vmem:[%s289 + $0x9a8] sm:$0xff]
        %v696 = vld [vmem:[%s289 + $0x9b0] sm:$0xff]
        %v697 = vld [vmem:[%s289 + $0x9b8] sm:$0xff]
        %v698 = vld [vmem:[%s289 + $0x9c0] sm:$0xff]
        %v699 = vld [vmem:[%s289 + $0x9c8] sm:$0xff]
        %v700 = vld [vmem:[%s289 + $0x9d0] sm:$0xff]
        %v701 = vld [vmem:[%s289 + $0x9d8] sm:$0xff]
        %v702 = vld [vmem:[%s289 + $0x9e0] sm:$0xff]
        %v703 = vld [vmem:[%s289 + $0x9e8] sm:$0xff]
        %v704 = vld [vmem:[%s289 + $0x9f0] sm:$0xff]
        %v705 = vld [vmem:[%s289 + $0x9f8] sm:$0xff]
        %v706 = vld [vmem:[%s289 + $0xa00] sm:$0xff]
        %v707 = vld [vmem:[%s289 + $0xa08] sm:$0xff]
        %v708 = vld [vmem:[%s289 + $0xa10] sm:$0xff]
        %v709 = vld [vmem:[%s289 + $0xa18] sm:$0xff]
        %v710 = vld [vmem:[%s289 + $0xa20] sm:$0xff]
        %v711 = vld [vmem:[%s289 + $0xa28] sm:$0xff]
        %v712 = vld [vmem:[%s289 + $0xa30] sm:$0xff]
        %v713 = vld [vmem:[%s289 + $0xa38] sm:$0xff]
        %v714 = vld [vmem:[%s289 + $0xa40] sm:$0xff]
        %v715 = vld [vmem:[%s289 + $0xa48] sm:$0xff]
        %v716 = vld [vmem:[%s289 + $0xa50] sm:$0xff]
        %v717 = vld [vmem:[%s289 + $0xa58] sm:$0xff]
        %v718 = vld [vmem:[%s289 + $0xa60] sm:$0xff]
        %v719 = vld [vmem:[%s289 + $0xa68] sm:$0xff]
        %v720 = vld [vmem:[%s289 + $0xa70] sm:$0xff]
        %v721 = vld [vmem:[%s289 + $0xa78] sm:$0xff]
        %v722 = vld [vmem:[%s289 + $0xa80] sm:$0xff]
        %v723 = vld [vmem:[%s289 + $0xa88] sm:$0xff]
        %v724 = vld [vmem:[%s289 + $0xa90] sm:$0xff]
        %v725 = vld [vmem:[%s289 + $0xa98] sm:$0xff]
        %v726 = vld [vmem:[%s289 + $0xaa0] sm:$0xff]
        %v727 = vld [vmem:[%s289 + $0xaa8] sm:$0xff]
        %v728 = vld [vmem:[%s289 + $0xab0] sm:$0xff]
        %v729 = vld [vmem:[%s289 + $0xab8] sm:$0xff]
        %v730 = vld [vmem:[%s289 + $0xac0] sm:$0xff]
        %v731 = vld [vmem:[%s289 + $0xac8] sm:$0xff]
        %v732 = vld [vmem:[%s289 + $0xad0] sm:$0xff]
        %v733 = vld [vmem:[%s289 + $0xad8] sm:$0xff]
        %v734 = vld [vmem:[%s289 + $0xae0] sm:$0xff]
        %v735 = vld [vmem:[%s289 + $0xae8] sm:$0xff]
        %v736 = vld [vmem:[%s289 + $0xaf0] sm:$0xff]
        %v737 = vld [vmem:[%s289 + $0xaf8] sm:$0xff]
        %v738 = vld [vmem:[%s289 + $0xb00] sm:$0xff]
        %v739 = vld [vmem:[%s289 + $0xb08] sm:$0xff]
        %v740 = vld [vmem:[%s289 + $0xb10] sm:$0xff]
        %v741 = vld [vmem:[%s289 + $0xb18] sm:$0xff]
        %v742 = vld [vmem:[%s289 + $0xb20] sm:$0xff]
        %v743 = vld [vmem:[%s289 + $0xb28] sm:$0xff]
        %v744 = vld [vmem:[%s289 + $0xb30] sm:$0xff]
        %v745 = vld [vmem:[%s289 + $0xb38] sm:$0xff]
        %v746 = vld [vmem:[%s289 + $0xb40] sm:$0xff]
        %v747 = vld [vmem:[%s289 + $0xb48] sm:$0xff]
        %v748 = vld [vmem:[%s289 + $0xb50] sm:$0xff]
        %v749 = vld [vmem:[%s289 + $0xb58] sm:$0xff]
        %v750 = vld [vmem:[%s289 + $0xb60] sm:$0xff]
        %v751 = vld [vmem:[%s289 + $0xb68] sm:$0xff]
        %v752 = vld [vmem:[%s289 + $0xb70] sm:$0xff]
        %v753 = vld [vmem:[%s289 + $0xb78] sm:$0xff]
        %v754 = vld [vmem:[%s289 + $0xb80] sm:$0xff]
        %v755 = vld [vmem:[%s289 + $0xb88] sm:$0xff]
        %v756 = vld [vmem:[%s289 + $0xb90] sm:$0xff]
        %v757 = vld [vmem:[%s289 + $0xb98] sm:$0xff]
        %v758 = vld [vmem:[%s289 + $0xba0] sm:$0xff]
        %v759 = vld [vmem:[%s289 + $0xba8] sm:$0xff]
        %v760 = vld [vmem:[%s289 + $0xbb0] sm:$0xff]
        %v761 = vld [vmem:[%s289 + $0xbb8] sm:$0xff]
        %v762 = vld [vmem:[%s289 + $0xbc0] sm:$0xff]
        %v763 = vld [vmem:[%s289 + $0xbc8] sm:$0xff]
        %v764 = vld [vmem:[%s289 + $0xbd0] sm:$0xff]
        %v765 = vld [vmem:[%s289 + $0xbd8] sm:$0xff]
        %v766 = vld [vmem:[%s289 + $0xbe0] sm:$0xff]
        %v767 = vld [vmem:[%s289 + $0xbe8] sm:$0xff]
        %v768 = vld [vmem:[%s289 + $0xbf0] sm:$0xff]
        %v769 = vld [vmem:[%s289 + $0xbf8] sm:$0xff]
        %v770 = vld [vmem:[%s289 + $0xc00] sm:$0xff]
        %v771 = vld [vmem:[%s289 + $0xc08] sm:$0xff]
        %v772 = vld [vmem:[%s289 + $0xc10] sm:$0xff]
        %v773 = vld [vmem:[%s289 + $0xc18] sm:$0xff]
        %v774 = vld [vmem:[%s289 + $0xc20] sm:$0xff]
        %v775 = vld [vmem:[%s289 + $0xc28] sm:$0xff]
        %v776 = vld [vmem:[%s289 + $0xc30] sm:$0xff]
        %v777 = vld [vmem:[%s289 + $0xc38] sm:$0xff]
        %v778 = vld [vmem:[%s289 + $0xc40] sm:$0xff]
        %v779 = vld [vmem:[%s289 + $0xc48] sm:$0xff]
        %v780 = vld [vmem:[%s289 + $0xc50] sm:$0xff]
        %v781 = vld [vmem:[%s289 + $0xc58] sm:$0xff]
        %v782 = vld [vmem:[%s289 + $0xc60] sm:$0xff]
        %v783 = vld [vmem:[%s289 + $0xc68] sm:$0xff]
        %v784 = vld [vmem:[%s289 + $0xc70] sm:$0xff]
        %v785 = vld [vmem:[%s289 + $0xc78] sm:$0xff]
        %v786 = vld [vmem:[%s289 + $0xc80] sm:$0xff]
        %v787 = vld [vmem:[%s289 + $0xc88] sm:$0xff]
        %v788 = vld [vmem:[%s289 + $0xc90] sm:$0xff]
        %v789 = vld [vmem:[%s289 + $0xc98] sm:$0xff]
        %v790 = vld [vmem:[%s289 + $0xca0] sm:$0xff]
        %v791 = vld [vmem:[%s289 + $0xca8] sm:$0xff]
        %v792 = vld [vmem:[%s289 + $0xcb0] sm:$0xff]
        %v793 = vld [vmem:[%s289 + $0xcb8] sm:$0xff]
        %v794 = vld [vmem:[%s289 + $0xcc0] sm:$0xff]
        %v795 = vld [vmem:[%s289 + $0xcc8] sm:$0xff]
        %v796 = vld [vmem:[%s289 + $0xcd0] sm:$0xff]
        %v797 = vld [vmem:[%s289 + $0xcd8] sm:$0xff]
        %v798 = vld [vmem:[%s289 + $0xce0] sm:$0xff]
        %v799 = vld [vmem:[%s289 + $0xce8] sm:$0xff]
        %v800 = vld [vmem:[%s289 + $0xcf0] sm:$0xff]
        %v801 = vld [vmem:[%s289 + $0xcf8] sm:$0xff]
        %v802 = vld [vmem:[%s289 + $0xd00] sm:$0xff]
        %v803 = vld [vmem:[%s289 + $0xd08] sm:$0xff]
        %v804 = vld [vmem:[%s289 + $0xd10] sm:$0xff]
        %v805 = vld [vmem:[%s289 + $0xd18] sm:$0xff]
        %v806 = vld [vmem:[%s289 + $0xd20] sm:$0xff]
        %v807 = vld [vmem:[%s289 + $0xd28] sm:$0xff]
        %v808 = vld [vmem:[%s289 + $0xd30] sm:$0xff]
        %v809 = vld [vmem:[%s289 + $0xd38] sm:$0xff]
        %v810 = vld [vmem:[%s289 + $0xd40] sm:$0xff]
        %v811 = vld [vmem:[%s289 + $0xd48] sm:$0xff]
        %v812 = vld [vmem:[%s289 + $0xd50] sm:$0xff]
        %v813 = vld [vmem:[%s289 + $0xd58] sm:$0xff]
        %v814 = vld [vmem:[%s289 + $0xd60] sm:$0xff]
        %v815 = vld [vmem:[%s289 + $0xd68] sm:$0xff]
        %v816 = vld [vmem:[%s289 + $0xd70] sm:$0xff]
        %v817 = vld [vmem:[%s289 + $0xd78] sm:$0xff]
        %v818 = vld [vmem:[%s289 + $0xd80] sm:$0xff]
        %v819 = vld [vmem:[%s289 + $0xd88] sm:$0xff]
        %v820 = vld [vmem:[%s289 + $0xd90] sm:$0xff]
        %v821 = vld [vmem:[%s289 + $0xd98] sm:$0xff]
        %v822 = vld [vmem:[%s289 + $0xda0] sm:$0xff]
        %v823 = vld [vmem:[%s289 + $0xda8] sm:$0xff]
        %v824 = vld [vmem:[%s289 + $0xdb0] sm:$0xff]
        %v825 = vld [vmem:[%s289 + $0xdb8] sm:$0xff]
        %v826 = vld [vmem:[%s289 + $0xdc0] sm:$0xff]
        %v827 = vld [vmem:[%s289 + $0xdc8] sm:$0xff]
        %v828 = vld [vmem:[%s289 + $0xdd0] sm:$0xff]
        %v829 = vld [vmem:[%s289 + $0xdd8] sm:$0xff]
        %v830 = vld [vmem:[%s289 + $0xde0] sm:$0xff]
        %v831 = vld [vmem:[%s289 + $0xde8] sm:$0xff]
        %v832 = vld [vmem:[%s289 + $0xdf0] sm:$0xff]
        %v833 = vld [vmem:[%s289 + $0xdf8] sm:$0xff]
        %v834 = vld [vmem:[%s2] sm:$0xff]
        %v835 = vld [vmem:[%s2 + $0x8] sm:$0xff]
        %v836 = vld [vmem:[%s2 + $0x10] sm:$0xff]
        %v837 = vld [vmem:[%s2 + $0x18] sm:$0xff]
        %v838 = vld [vmem:[%s2 + $0x20] sm:$0xff]
        %v839 = vld [vmem:[%s2 + $0x28] sm:$0xff]
        %v840 = vld [vmem:[%s2 + $0x30] sm:$0xff]
        %v841 = vld [vmem:[%s2 + $0x38] sm:$0xff]
        %843 = vset.pattern.permute.xlu0 0
        %844 = vperm.xlu0 %843, %v834
        %v845 = vpop.permute.xlu0 %844
        %848 = vset.pattern.permute.xlu0 0
        %849 = vperm.xlu0 %848, %v835
        %v850 = vpop.permute.xlu0 %849
        %853 = vset.pattern.permute.xlu0 0
        %854 = vperm.xlu0 %853, %v836
        %v855 = vpop.permute.xlu0 %854
        %858 = vset.pattern.permute.xlu0 0
        %859 = vperm.xlu0 %858, %v837
        %v860 = vpop.permute.xlu0 %859
        %863 = vset.pattern.permute.xlu0 0
        %864 = vperm.xlu0 %863, %v838
        %v865 = vpop.permute.xlu0 %864
        %868 = vset.pattern.permute.xlu0 0
        %869 = vperm.xlu0 %868, %v839
        %v870 = vpop.permute.xlu0 %869
        %873 = vset.pattern.permute.xlu0 0
        %874 = vperm.xlu0 %873, %v840
        %v875 = vpop.permute.xlu0 %874
        %878 = vset.pattern.permute.xlu0 0
        %879 = vperm.xlu0 %878, %v841
        %v880 = vpop.permute.xlu0 %879
        %882 = vmatprep.subr.mxu0 %v387
        %883 = vmatpush1.msra.mxu0 %v386
        %884 = vmatprep.subr.mxu0 %v391
        %885 = vmatpush1.msra.mxu0 %v390
        %886 = vmatprep.subr.mxu0 %v395
        %887 = vmatpush1.msra.mxu0 %v394
        %888 = vmatprep.subr.mxu0 %v399
        %889 = vmatpush1.msra.mxu0 %v398
        %890 = vmatprep.subr.mxu0 %v403
        %891 = vmatpush1.msra.mxu0 %v402
        %892 = vmatprep.subr.mxu0 %v407
        %893 = vmatpush1.msra.mxu0 %v406
        %894 = vmatprep.subr.mxu0 %v411
        %895 = vmatpush1.msra.mxu0 %v410
        %896 = vmatprep.subr.mxu0 %v415
        %897 = vmatpush1.msra.mxu0 %v414
        %898 = vmatprep.subr.mxu0 %v419
        %899 = vmatpush1.msra.mxu0 %v418
        %900 = vmatprep.subr.mxu0 %v423
        %901 = vmatpush1.msra.mxu0 %v422
        %902 = vmatprep.subr.mxu0 %v427
        %903 = vmatpush1.msra.mxu0 %v426
        %904 = vmatprep.subr.mxu0 %v431
        %905 = vmatpush1.msra.mxu0 %v430
        %906 = vmatprep.subr.mxu0 %v435
        %907 = vmatpush1.msra.mxu0 %v434
        %908 = vmatprep.subr.mxu0 %v439
        %909 = vmatpush1.msra.mxu0 %v438
        %910 = vmatprep.subr.mxu0 %v443
        %911 = vmatpush1.msra.mxu0 %v442
        %912 = vmatprep.subr.mxu0 %v447
        %913 = vmatpush1.msra.mxu0 %v446
        %914 = vmatprep.subr.mxu0 %v451
        %915 = vmatpush1.msra.mxu0 %v450
        %916 = vmatprep.subr.mxu0 %v455
        %917 = vmatpush1.msra.mxu0 %v454
        %918 = vmatprep.subr.mxu0 %v459
        %919 = vmatpush1.msra.mxu0 %v458
        %920 = vmatprep.subr.mxu0 %v463
        %921 = vmatpush1.msra.mxu0 %v462
        %922 = vmatprep.subr.mxu0 %v467
        %923 = vmatpush1.msra.mxu0 %v466
        %924 = vmatprep.subr.mxu0 %v471
        %925 = vmatpush1.msra.mxu0 %v470
        %926 = vmatprep.subr.mxu0 %v475
        %927 = vmatpush1.msra.mxu0 %v474
        %928 = vmatprep.subr.mxu0 %v479
        %929 = vmatpush1.msra.mxu0 %v478
        %930 = vmatprep.subr.mxu0 %v483
        %931 = vmatpush1.msra.mxu0 %v482
        %932 = vmatprep.subr.mxu0 %v487
        %933 = vmatpush1.msra.mxu0 %v486
        %934 = vmatprep.subr.mxu0 %v491
        %935 = vmatpush1.msra.mxu0 %v490
        %936 = vmatprep.subr.mxu0 %v495
        %937 = vmatpush1.msra.mxu0 %v494
        %938 = vmatprep.subr.mxu0 %v499
        %939 = vmatpush1.msra.mxu0 %v498
        %940 = vmatprep.subr.mxu0 %v503
        %941 = vmatpush1.msra.mxu0 %v502
        %942 = vmatprep.subr.mxu0 %v507
        %943 = vmatpush1.msra.mxu0 %v506
        %944 = vmatprep.subr.mxu0 %v511
        %945 = vmatpush1.msra.mxu0 %v510
        %946 = vmatprep.mubr.f32.mxu0 %v331
        %947 = vmatmul.mubr.f32.gmra.mrb[0].mxu0 %v330
        %v948 = vpop.f32.mrb[0].mxu0
        %v949 = vadd.f32 %v845, %v948
        %v950 = vpop.f32.mrb[0].mxu0
        %v951 = vadd.f32 %v845, %v950
        %952 = vmatprep.mubr.f32.mxu0 %v338
        %953 = vmatmul.mubr.f32.gmra.mrb[0].mxu0 %v337
        %v954 = vpop.f32.mrb[0].mxu0
        %v955 = vadd.f32 %v850, %v954
        %v956 = vpop.f32.mrb[0].mxu0
        %v957 = vadd.f32 %v850, %v956
        %958 = vmatprep.mubr.f32.mxu0 %v345
        %959 = vmatmul.mubr.f32.gmra.mrb[0].mxu0 %v344
        %v960 = vpop.f32.mrb[0].mxu0
        %v961 = vadd.f32 %v855, %v960
        %v962 = vpop.f32.mrb[0].mxu0
        %v963 = vadd.f32 %v855, %v962
        %964 = vmatprep.mubr.f32.mxu0 %v352
        %965 = vmatmul.mubr.f32.gmra.mrb[0].mxu0 %v351
        %v966 = vpop.f32.mrb[0].mxu0
        %v967 = vadd.f32 %v860, %v966
        %v968 = vpop.f32.mrb[0].mxu0
        %v969 = vadd.f32 %v860, %v968
        %970 = vmatprep.mubr.f32.mxu0 %v359
        %971 = vmatmul.mubr.f32.gmra.mrb[0].mxu0 %v358
        %v972 = vpop.f32.mrb[0].mxu0
        %v973 = vadd.f32 %v865, %v972
        %v974 = vpop.f32.mrb[0].mxu0
        %v975 = vadd.f32 %v865, %v974
        %976 = vmatprep.mubr.f32.mxu0 %v366
        %977 = vmatmul.mubr.f32.gmra.mrb[0].mxu0 %v365
        %v978 = vpop.f32.mrb[0].mxu0
        %v979 = vadd.f32 %v870, %v978
        %v980 = vpop.f32.mrb[0].mxu0
        %v981 = vadd.f32 %v870, %v980
        %982 = vmatprep.mubr.f32.mxu0 %v373
        %983 = vmatmul.mubr.f32.gmra.mrb[0].mxu0 %v372
        %v984 = vpop.f32.mrb[0].mxu0
        %v985 = vadd.f32 %v875, %v984
        %v986 = vpop.f32.mrb[0].mxu0
        %v987 = vadd.f32 %v875, %v986
        %988 = vmatprep.mubr.f32.mxu0 %v380
        %989 = vmatmul.mubr.f32.gmra.mrb[0].mxu0 %v379
        %v990 = vpop.f32.mrb[0].mxu0
        %v991 = vadd.f32 %v880, %v990
        %v992 = vpop.f32.mrb[0].mxu0
        %v993 = vadd.f32 %v880, %v992
        %994 = vdwg.mxu0
        %995 = vmatprep.subr.mxu0 %v515
        %996 = vmatpush1.msra.mxu0 %v514
        %997 = vmatprep.subr.mxu0 %v519
        %998 = vmatpush1.msra.mxu0 %v518
        %999 = vmatprep.subr.mxu0 %v523
        %1000 = vmatpush1.msra.mxu0 %v522
        %1001 = vmatprep.subr.mxu0 %v527
        %1002 = vmatpush1.msra.mxu0 %v526
        %1003 = vmatprep.subr.mxu0 %v531
        %1004 = vmatpush1.msra.mxu0 %v530
        %1005 = vmatprep.subr.mxu0 %v535
        %1006 = vmatpush1.msra.mxu0 %v534
        %1007 = vmatprep.subr.mxu0 %v539
        %1008 = vmatpush1.msra.mxu0 %v538
        %1009 = vmatprep.subr.mxu0 %v543
        %1010 = vmatpush1.msra.mxu0 %v542
        %1011 = vmatprep.subr.mxu0 %v547
        %1012 = vmatpush1.msra.mxu0 %v546
        %1013 = vmatprep.subr.mxu0 %v551
        %1014 = vmatpush1.msra.mxu0 %v550
        %1015 = vmatprep.subr.mxu0 %v555
        %1016 = vmatpush1.msra.mxu0 %v554
        %1017 = vmatprep.subr.mxu0 %v559
        %1018 = vmatpush1.msra.mxu0 %v558
        %1019 = vmatprep.subr.mxu0 %v563
        %1020 = vmatpush1.msra.mxu0 %v562
        %1021 = vmatprep.subr.mxu0 %v567
        %1022 = vmatpush1.msra.mxu0 %v566
        %1023 = vmatprep.subr.mxu0 %v571
        %1024 = vmatpush1.msra.mxu0 %v570
        %1025 = vmatprep.subr.mxu0 %v575
        %1026 = vmatpush1.msra.mxu0 %v574
        %1027 = vmatprep.subr.mxu0 %v579
        %1028 = vmatpush1.msra.mxu0 %v578
        %1029 = vmatprep.subr.mxu0 %v583
        %1030 = vmatpush1.msra.mxu0 %v582
        %1031 = vmatprep.subr.mxu0 %v587
        %1032 = vmatpush1.msra.mxu0 %v586
        %1033 = vmatprep.subr.mxu0 %v591
        %1034 = vmatpush1.msra.mxu0 %v590
        %1035 = vmatprep.subr.mxu0 %v595
        %1036 = vmatpush1.msra.mxu0 %v594
        %1037 = vmatprep.subr.mxu0 %v599
        %1038 = vmatpush1.msra.mxu0 %v598
        %1039 = vmatprep.subr.mxu0 %v603
        %1040 = vmatpush1.msra.mxu0 %v602
        %1041 = vmatprep.subr.mxu0 %v607
        %1042 = vmatpush1.msra.mxu0 %v606
        %1043 = vmatprep.subr.mxu0 %v611
        %1044 = vmatpush1.msra.mxu0 %v610
        %1045 = vmatprep.subr.mxu0 %v615
        %1046 = vmatpush1.msra.mxu0 %v614
        %1047 = vmatprep.subr.mxu0 %v619
        %1048 = vmatpush1.msra.mxu0 %v618
        %1049 = vmatprep.subr.mxu0 %v623
        %1050 = vmatpush1.msra.mxu0 %v622
        %1051 = vmatprep.subr.mxu0 %v627
        %1052 = vmatpush1.msra.mxu0 %v626
        %1053 = vmatprep.subr.mxu0 %v631
        %1054 = vmatpush1.msra.mxu0 %v630
        %1055 = vmatprep.subr.mxu0 %v635
        %1056 = vmatpush1.msra.mxu0 %v634
        %1057 = vmatprep.subr.mxu0 %v639
        %1058 = vmatpush1.msra.mxu0 %v638
        %1059 = vmatprep.mubr.f32.mxu0 %v333
        %1060 = vmatmul.mubr.f32.gmra.mrb[0].mxu0 %v332
        %v1061 = vpop.f32.mrb[0].mxu0
        %v1062 = vadd.f32 %v949, %v1061
        %v1063 = vpop.f32.mrb[0].mxu0
        %v1064 = vadd.f32 %v951, %v1063
        %1065 = vmatprep.mubr.f32.mxu0 %v340
        %1066 = vmatmul.mubr.f32.gmra.mrb[0].mxu0 %v339
        %v1067 = vpop.f32.mrb[0].mxu0
        %v1068 = vadd.f32 %v955, %v1067
        %v1069 = vpop.f32.mrb[0].mxu0
        %v1070 = vadd.f32 %v957, %v1069
        %1071 = vmatprep.mubr.f32.mxu0 %v347
        %1072 = vmatmul.mubr.f32.gmra.mrb[0].mxu0 %v346
        %v1073 = vpop.f32.mrb[0].mxu0
        %v1074 = vadd.f32 %v961, %v1073
        %v1075 = vpop.f32.mrb[0].mxu0
        %v1076 = vadd.f32 %v963, %v1075
        %1077 = vmatprep.mubr.f32.mxu0 %v354
        %1078 = vmatmul.mubr.f32.gmra.mrb[0].mxu0 %v353
        %v1079 = vpop.f32.mrb[0].mxu0
        %v1080 = vadd.f32 %v967, %v1079
        %v1081 = vpop.f32.mrb[0].mxu0
        %v1082 = vadd.f32 %v969, %v1081
        %1083 = vmatprep.mubr.f32.mxu0 %v361
        %1084 = vmatmul.mubr.f32.gmra.mrb[0].mxu0 %v360
        %v1085 = vpop.f32.mrb[0].mxu0
        %v1086 = vadd.f32 %v973, %v1085
        %v1087 = vpop.f32.mrb[0].mxu0
        %v1088 = vadd.f32 %v975, %v1087
        %1089 = vmatprep.mubr.f32.mxu0 %v368
        %1090 = vmatmul.mubr.f32.gmra.mrb[0].mxu0 %v367
        %v1091 = vpop.f32.mrb[0].mxu0
        %v1092 = vadd.f32 %v979, %v1091
        %v1093 = vpop.f32.mrb[0].mxu0
        %v1094 = vadd.f32 %v981, %v1093
        %1095 = vmatprep.mubr.f32.mxu0 %v375
        %1096 = vmatmul.mubr.f32.gmra.mrb[0].mxu0 %v374
        %v1097 = vpop.f32.mrb[0].mxu0
        %v1098 = vadd.f32 %v985, %v1097
        %v1099 = vpop.f32.mrb[0].mxu0
        %v1100 = vadd.f32 %v987, %v1099
        %1101 = vmatprep.mubr.f32.mxu0 %v382
        %1102 = vmatmul.mubr.f32.gmra.mrb[0].mxu0 %v381
        %v1103 = vpop.f32.mrb[0].mxu0
        %v1104 = vadd.f32 %v991, %v1103
        %v1105 = vpop.f32.mrb[0].mxu0
        %v1106 = vadd.f32 %v993, %v1105
        %1107 = vdwg.mxu0
        %1108 = vmatprep.subr.mxu0 %v643
        %1109 = vmatpush1.msra.mxu0 %v642
        %1110 = vmatprep.subr.mxu0 %v647
        %1111 = vmatpush1.msra.mxu0 %v646
        %1112 = vmatprep.subr.mxu0 %v651
        %1113 = vmatpush1.msra.mxu0 %v650
        %1114 = vmatprep.subr.mxu0 %v655
        %1115 = vmatpush1.msra.mxu0 %v654
        %1116 = vmatprep.subr.mxu0 %v659
        %1117 = vmatpush1.msra.mxu0 %v658
        %1118 = vmatprep.subr.mxu0 %v663
        %1119 = vmatpush1.msra.mxu0 %v662
        %1120 = vmatprep.subr.mxu0 %v667
        %1121 = vmatpush1.msra.mxu0 %v666
        %1122 = vmatprep.subr.mxu0 %v671
        %1123 = vmatpush1.msra.mxu0 %v670
        %1124 = vmatprep.subr.mxu0 %v675
        %1125 = vmatpush1.msra.mxu0 %v674
        %1126 = vmatprep.subr.mxu0 %v679
        %1127 = vmatpush1.msra.mxu0 %v678
        %1128 = vmatprep.subr.mxu0 %v683
        %1129 = vmatpush1.msra.mxu0 %v682
        %1130 = vmatprep.subr.mxu0 %v687
        %1131 = vmatpush1.msra.mxu0 %v686
        %1132 = vmatprep.subr.mxu0 %v691
        %1133 = vmatpush1.msra.mxu0 %v690
        %1134 = vmatprep.subr.mxu0 %v695
        %1135 = vmatpush1.msra.mxu0 %v694
        %1136 = vmatprep.subr.mxu0 %v699
        %1137 = vmatpush1.msra.mxu0 %v698
        %1138 = vmatprep.subr.mxu0 %v703
        %1139 = vmatpush1.msra.mxu0 %v702
        %1140 = vmatprep.subr.mxu0 %v707
        %1141 = vmatpush1.msra.mxu0 %v706
        %1142 = vmatprep.subr.mxu0 %v711
        %1143 = vmatpush1.msra.mxu0 %v710
        %1144 = vmatprep.subr.mxu0 %v715
        %1145 = vmatpush1.msra.mxu0 %v714
        %1146 = vmatprep.subr.mxu0 %v719
        %1147 = vmatpush1.msra.mxu0 %v718
        %1148 = vmatprep.subr.mxu0 %v723
        %1149 = vmatpush1.msra.mxu0 %v722
        %1150 = vmatprep.subr.mxu0 %v727
        %1151 = vmatpush1.msra.mxu0 %v726
        %1152 = vmatprep.subr.mxu0 %v731
        %1153 = vmatpush1.msra.mxu0 %v730
        %1154 = vmatprep.subr.mxu0 %v735
        %1155 = vmatpush1.msra.mxu0 %v734
        %1156 = vmatprep.subr.mxu0 %v739
        %1157 = vmatpush1.msra.mxu0 %v738
        %1158 = vmatprep.subr.mxu0 %v743
        %1159 = vmatpush1.msra.mxu0 %v742
        %1160 = vmatprep.subr.mxu0 %v747
        %1161 = vmatpush1.msra.mxu0 %v746
        %1162 = vmatprep.subr.mxu0 %v751
        %1163 = vmatpush1.msra.mxu0 %v750
        %1164 = vmatprep.subr.mxu0 %v755
        %1165 = vmatpush1.msra.mxu0 %v754
        %1166 = vmatprep.subr.mxu0 %v759
        %1167 = vmatpush1.msra.mxu0 %v758
        %1168 = vmatprep.subr.mxu0 %v763
        %1169 = vmatpush1.msra.mxu0 %v762
        %1170 = vmatprep.subr.mxu0 %v767
        %1171 = vmatpush1.msra.mxu0 %v766
        %1172 = vmatprep.mubr.f32.mxu0 %v335
        %1173 = vmatmul.mubr.f32.gmra.mrb[0].mxu0 %v334
        %v1174 = vpop.f32.mrb[0].mxu0
        %v1175 = vadd.f32 %v1062, %v1174
        %v1176 = vpop.f32.mrb[0].mxu0
        %v1177 = vadd.f32 %v1064, %v1176
        %1178 = vmatprep.mubr.f32.mxu0 %v342
        %1179 = vmatmul.mubr.f32.gmra.mrb[0].mxu0 %v341
        %v1180 = vpop.f32.mrb[0].mxu0
        %v1181 = vadd.f32 %v1068, %v1180
        %v1182 = vpop.f32.mrb[0].mxu0
        %v1183 = vadd.f32 %v1070, %v1182
        %1184 = vmatprep.mubr.f32.mxu0 %v349
        %1185 = vmatmul.mubr.f32.gmra.mrb[0].mxu0 %v348
        %v1186 = vpop.f32.mrb[0].mxu0
        %v1187 = vadd.f32 %v1074, %v1186
        %v1188 = vpop.f32.mrb[0].mxu0
        %v1189 = vadd.f32 %v1076, %v1188
        %1190 = vmatprep.mubr.f32.mxu0 %v356
        %1191 = vmatmul.mubr.f32.gmra.mrb[0].mxu0 %v355
        %v1192 = vpop.f32.mrb[0].mxu0
        %v1193 = vadd.f32 %v1080, %v1192
        %v1194 = vpop.f32.mrb[0].mxu0
        %v1195 = vadd.f32 %v1082, %v1194
        %1196 = vmatprep.mubr.f32.mxu0 %v363
        %1197 = vmatmul.mubr.f32.gmra.mrb[0].mxu0 %v362
        %v1198 = vpop.f32.mrb[0].mxu0
        %v1199 = vadd.f32 %v1086, %v1198
        %v1200 = vpop.f32.mrb[0].mxu0
        %v1201 = vadd.f32 %v1088, %v1200
        %1202 = vmatprep.mubr.f32.mxu0 %v370
        %1203 = vmatmul.mubr.f32.gmra.mrb[0].mxu0 %v369
        %v1204 = vpop.f32.mrb[0].mxu0
        %v1205 = vadd.f32 %v1092, %v1204
        %v1206 = vpop.f32.mrb[0].mxu0
        %v1207 = vadd.f32 %v1094, %v1206
        %1208 = vmatprep.mubr.f32.mxu0 %v377
        %1209 = vmatmul.mubr.f32.gmra.mrb[0].mxu0 %v376
        %v1210 = vpop.f32.mrb[0].mxu0
        %v1211 = vadd.f32 %v1098, %v1210
        %v1212 = vpop.f32.mrb[0].mxu0
        %v1213 = vadd.f32 %v1100, %v1212
        %1214 = vmatprep.mubr.f32.mxu0 %v384
        %1215 = vmatmul.mubr.f32.gmra.mrb[0].mxu0 %v383
        %v1216 = vpop.f32.mrb[0].mxu0
        %v1217 = vadd.f32 %v1104, %v1216
        %v1218 = vpop.f32.mrb[0].mxu0
        %v1219 = vadd.f32 %v1106, %v1218
        %1220 = vdwg.mxu0
        %1221 = vmatprep.subr.mxu0 %v771
        %1222 = vmatpush1.msra.mxu0 %v770
        %1223 = vmatprep.subr.mxu0 %v775
        %1224 = vmatpush1.msra.mxu0 %v774
        %1225 = vmatprep.subr.mxu0 %v779
        %1226 = vmatpush1.msra.mxu0 %v778
        %1227 = vmatprep.subr.mxu0 %v783
        %1228 = vmatpush1.msra.mxu0 %v782
        %1229 = vmatprep.subr.mxu0 %v787
        %1230 = vmatpush1.msra.mxu0 %v786
        %1231 = vmatprep.subr.mxu0 %v791
        %1232 = vmatpush1.msra.mxu0 %v790
        %1233 = vmatprep.subr.mxu0 %v795
        %1234 = vmatpush1.msra.mxu0 %v794
        %1235 = vmatprep.subr.mxu0 %v799
        %1236 = vmatpush1.msra.mxu0 %v798
        %1237 = vmatprep.subr.mxu0 %v803
        %1238 = vmatpush1.msra.mxu0 %v802
        %1239 = vmatprep.subr.mxu0 %v807
        %1240 = vmatpush1.msra.mxu0 %v806
        %1241 = vmatprep.subr.mxu0 %v811
        %1242 = vmatpush1.msra.mxu0 %v810
        %1243 = vmatprep.subr.mxu0 %v815
        %1244 = vmatpush1.msra.mxu0 %v814
        %1245 = vmatprep.subr.mxu0 %v819
        %1246 = vmatpush1.msra.mxu0 %v818
        %1247 = vmatprep.subr.mxu0 %v823
        %1248 = vmatpush1.msra.mxu0 %v822
        %1249 = vmatprep.subr.mxu0 %v827
        %1250 = vmatpush1.msra.mxu0 %v826
        %1251 = vmatprep.subr.mxu0 %v831
        %1252 = vmatpush1.msra.mxu0 %v830
        %1253 = vmatprep.subr.mxu0 0.0
        %1254 = vmatpush1.msra.mxu0 0.0
        %1255 = vmatprep.subr.mxu0 0.0
        %1256 = vmatpush1.msra.mxu0 0.0
        %1257 = vmatprep.subr.mxu0 0.0
        %1258 = vmatpush1.msra.mxu0 0.0
        %1259 = vmatprep.subr.mxu0 0.0
        %1260 = vmatpush1.msra.mxu0 0.0
        %1261 = vmatprep.subr.mxu0 0.0
        %1262 = vmatpush1.msra.mxu0 0.0
        %1263 = vmatprep.subr.mxu0 0.0
        %1264 = vmatpush1.msra.mxu0 0.0
        %1265 = vmatprep.subr.mxu0 0.0
        %1266 = vmatpush1.msra.mxu0 0.0
        %1267 = vmatprep.subr.mxu0 0.0
        %1268 = vmatpush1.msra.mxu0 0.0
        %1269 = vmatprep.subr.mxu0 0.0
        %1270 = vmatpush1.msra.mxu0 0.0
        %1271 = vmatprep.subr.mxu0 0.0
        %1272 = vmatpush1.msra.mxu0 0.0
        %1273 = vmatprep.subr.mxu0 0.0
        %1274 = vmatpush1.msra.mxu0 0.0
        %1275 = vmatprep.subr.mxu0 0.0
        %1276 = vmatpush1.msra.mxu0 0.0
        %1277 = vmatprep.subr.mxu0 0.0
        %1278 = vmatpush1.msra.mxu0 0.0
        %1279 = vmatprep.subr.mxu0 0.0
        %1280 = vmatpush1.msra.mxu0 0.0
        %1281 = vmatprep.subr.mxu0 0.0
        %1282 = vmatpush1.msra.mxu0 0.0
        %1283 = vmatprep.subr.mxu0 0.0
        %1284 = vmatpush1.msra.mxu0 0.0
        %1285 = vmatprep.mubr.f32.mxu0 0.0
        %1286 = vmatmul.mubr.f32.gmra.mrb[0].mxu0 %v336
        %v1287 = vpop.f32.mrb[0].mxu0
        %v1288 = vadd.f32 %v1175, %v1287
        %v1289 = vpop.f32.mrb[0].mxu0
        %v1290 = vadd.f32 %v1177, %v1289
        %1291 = vmatprep.mubr.f32.mxu0 0.0
        %1292 = vmatmul.mubr.f32.gmra.mrb[0].mxu0 %v343
        %v1293 = vpop.f32.mrb[0].mxu0
        %v1294 = vadd.f32 %v1181, %v1293
        %v1295 = vpop.f32.mrb[0].mxu0
        %v1296 = vadd.f32 %v1183, %v1295
        %1297 = vmatprep.mubr.f32.mxu0 0.0
        %1298 = vmatmul.mubr.f32.gmra.mrb[0].mxu0 %v350
        %v1299 = vpop.f32.mrb[0].mxu0
        %v1300 = vadd.f32 %v1187, %v1299
        %v1301 = vpop.f32.mrb[0].mxu0
        %v1302 = vadd.f32 %v1189, %v1301
        %1303 = vmatprep.mubr.f32.mxu0 0.0
        %1304 = vmatmul.mubr.f32.gmra.mrb[0].mxu0 %v357
        %v1305 = vpop.f32.mrb[0].mxu0
        %v1306 = vadd.f32 %v1193, %v1305
        %v1307 = vpop.f32.mrb[0].mxu0
        %v1308 = vadd.f32 %v1195, %v1307
        %1309 = vmatprep.mubr.f32.mxu0 0.0
        %1310 = vmatmul.mubr.f32.gmra.mrb[0].mxu0 %v364
        %v1311 = vpop.f32.mrb[0].mxu0
        %v1312 = vadd.f32 %v1199, %v1311
        %v1313 = vpop.f32.mrb[0].mxu0
        %v1314 = vadd.f32 %v1201, %v1313
        %1315 = vmatprep.mubr.f32.mxu0 0.0
        %1316 = vmatmul.mubr.f32.gmra.mrb[0].mxu0 %v371
        %v1317 = vpop.f32.mrb[0].mxu0
        %v1318 = vadd.f32 %v1205, %v1317
        %v1319 = vpop.f32.mrb[0].mxu0
        %v1320 = vadd.f32 %v1207, %v1319
        %1321 = vmatprep.mubr.f32.mxu0 0.0
        %1322 = vmatmul.mubr.f32.gmra.mrb[0].mxu0 %v378
        %v1323 = vpop.f32.mrb[0].mxu0
        %v1324 = vadd.f32 %v1211, %v1323
        %v1325 = vpop.f32.mrb[0].mxu0
        %v1326 = vadd.f32 %v1213, %v1325
        %1327 = vmatprep.mubr.f32.mxu0 0.0
        %1328 = vmatmul.mubr.f32.gmra.mrb[0].mxu0 %v385
        %v1329 = vpop.f32.mrb[0].mxu0
        %v1330 = vadd.f32 %v1217, %v1329
        %v1331 = vpop.f32.mrb[0].mxu0
        %v1332 = vadd.f32 %v1219, %v1331
        %1333 = vdwg.mxu0
        %1334 = vmatprep.subr.mxu0 %v389
        %1335 = vmatpush1.msra.mxu0 %v388
        %1336 = vmatprep.subr.mxu0 %v393
        %1337 = vmatpush1.msra.mxu0 %v392
        %1338 = vmatprep.subr.mxu0 %v397
        %1339 = vmatpush1.msra.mxu0 %v396
        %1340 = vmatprep.subr.mxu0 %v401
        %1341 = vmatpush1.msra.mxu0 %v400
        %1342 = vmatprep.subr.mxu0 %v405
        %1343 = vmatpush1.msra.mxu0 %v404
        %1344 = vmatprep.subr.mxu0 %v409
        %1345 = vmatpush1.msra.mxu0 %v408
        %1346 = vmatprep.subr.mxu0 %v413
        %1347 = vmatpush1.msra.mxu0 %v412
        %1348 = vmatprep.subr.mxu0 %v417
        %1349 = vmatpush1.msra.mxu0 %v416
        %1350 = vmatprep.subr.mxu0 %v421
        %1351 = vmatpush1.msra.mxu0 %v420
        %1352 = vmatprep.subr.mxu0 %v425
        %1353 = vmatpush1.msra.mxu0 %v424
        %1354 = vmatprep.subr.mxu0 %v429
        %1355 = vmatpush1.msra.mxu0 %v428
        %1356 = vmatprep.subr.mxu0 %v433
        %1357 = vmatpush1.msra.mxu0 %v432
        %1358 = vmatprep.subr.mxu0 %v437
        %1359 = vmatpush1.msra.mxu0 %v436
        %1360 = vmatprep.subr.mxu0 %v441
        %1361 = vmatpush1.msra.mxu0 %v440
        %1362 = vmatprep.subr.mxu0 %v445
        %1363 = vmatpush1.msra.mxu0 %v444
        %1364 = vmatprep.subr.mxu0 %v449
        %1365 = vmatpush1.msra.mxu0 %v448
        %1366 = vmatprep.subr.mxu0 %v453
        %1367 = vmatpush1.msra.mxu0 %v452
        %1368 = vmatprep.subr.mxu0 %v457
        %1369 = vmatpush1.msra.mxu0 %v456
        %1370 = vmatprep.subr.mxu0 %v461
        %1371 = vmatpush1.msra.mxu0 %v460
        %1372 = vmatprep.subr.mxu0 %v465
        %1373 = vmatpush1.msra.mxu0 %v464
        %1374 = vmatprep.subr.mxu0 %v469
        %1375 = vmatpush1.msra.mxu0 %v468
        %1376 = vmatprep.subr.mxu0 %v473
        %1377 = vmatpush1.msra.mxu0 %v472
        %1378 = vmatprep.subr.mxu0 %v477
        %1379 = vmatpush1.msra.mxu0 %v476
        %1380 = vmatprep.subr.mxu0 %v481
        %1381 = vmatpush1.msra.mxu0 %v480
        %1382 = vmatprep.subr.mxu0 %v485
        %1383 = vmatpush1.msra.mxu0 %v484
        %1384 = vmatprep.subr.mxu0 %v489
        %1385 = vmatpush1.msra.mxu0 %v488
        %1386 = vmatprep.subr.mxu0 %v493
        %1387 = vmatpush1.msra.mxu0 %v492
        %1388 = vmatprep.subr.mxu0 %v497
        %1389 = vmatpush1.msra.mxu0 %v496
        %1390 = vmatprep.subr.mxu0 %v501
        %1391 = vmatpush1.msra.mxu0 %v500
        %1392 = vmatprep.subr.mxu0 %v505
        %1393 = vmatpush1.msra.mxu0 %v504
        %1394 = vmatprep.subr.mxu0 %v509
        %1395 = vmatpush1.msra.mxu0 %v508
        %1396 = vmatprep.subr.mxu0 %v513
        %1397 = vmatpush1.msra.mxu0 %v512
        %1398 = vmatprep.mubr.f32.mxu0 %v331
        %1399 = vmatmul.mubr.f32.gmra.mrb[0].mxu0 %v330
        %v1400 = vpop.f32.mrb[0].mxu0
        %v1401 = vadd.f32 %v845, %v1400
        %v1402 = vpop.f32.mrb[0].mxu0
        %v1403 = vadd.f32 %v845, %v1402
        %1404 = vmatprep.mubr.f32.mxu0 %v338
        %1405 = vmatmul.mubr.f32.gmra.mrb[0].mxu0 %v337
        %v1406 = vpop.f32.mrb[0].mxu0
        %v1407 = vadd.f32 %v850, %v1406
        %v1408 = vpop.f32.mrb[0].mxu0
        %v1409 = vadd.f32 %v850, %v1408
        %1410 = vmatprep.mubr.f32.mxu0 %v345
        %1411 = vmatmul.mubr.f32.gmra.mrb[0].mxu0 %v344
        %v1412 = vpop.f32.mrb[0].mxu0
        %v1413 = vadd.f32 %v855, %v1412
        %v1414 = vpop.f32.mrb[0].mxu0
        %v1415 = vadd.f32 %v855, %v1414
        %1416 = vmatprep.mubr.f32.mxu0 %v352
        %1417 = vmatmul.mubr.f32.gmra.mrb[0].mxu0 %v351
        %v1418 = vpop.f32.mrb[0].mxu0
        %v1419 = vadd.f32 %v860, %v1418
        %v1420 = vpop.f32.mrb[0].mxu0
        %v1421 = vadd.f32 %v860, %v1420
        %1422 = vmatprep.mubr.f32.mxu0 %v359
        %1423 = vmatmul.mubr.f32.gmra.mrb[0].mxu0 %v358
        %v1424 = vpop.f32.mrb[0].mxu0
        %v1425 = vadd.f32 %v865, %v1424
        %v1426 = vpop.f32.mrb[0].mxu0
        %v1427 = vadd.f32 %v865, %v1426
        %1428 = vmatprep.mubr.f32.mxu0 %v366
        %1429 = vmatmul.mubr.f32.gmra.mrb[0].mxu0 %v365
        %v1430 = vpop.f32.mrb[0].mxu0
        %v1431 = vadd.f32 %v870, %v1430
        %v1432 = vpop.f32.mrb[0].mxu0
        %v1433 = vadd.f32 %v870, %v1432
        %1434 = vmatprep.mubr.f32.mxu0 %v373
        %1435 = vmatmul.mubr.f32.gmra.mrb[0].mxu0 %v372
        %v1436 = vpop.f32.mrb[0].mxu0
        %v1437 = vadd.f32 %v875, %v1436
        %v1438 = vpop.f32.mrb[0].mxu0
        %v1439 = vadd.f32 %v875, %v1438
        %1440 = vmatprep.mubr.f32.mxu0 %v380
        %1441 = vmatmul.mubr.f32.gmra.mrb[0].mxu0 %v379
        %v1442 = vpop.f32.mrb[0].mxu0
        %v1443 = vadd.f32 %v880, %v1442
        %v1444 = vpop.f32.mrb[0].mxu0
        %v1445 = vadd.f32 %v880, %v1444
        %1446 = vdwg.mxu0
        %1447 = vmatprep.subr.mxu0 %v517
        %1448 = vmatpush1.msra.mxu0 %v516
        %1449 = vmatprep.subr.mxu0 %v521
        %1450 = vmatpush1.msra.mxu0 %v520
        %1451 = vmatprep.subr.mxu0 %v525
        %1452 = vmatpush1.msra.mxu0 %v524
        %1453 = vmatprep.subr.mxu0 %v529
        %1454 = vmatpush1.msra.mxu0 %v528
        %1455 = vmatprep.subr.mxu0 %v533
        %1456 = vmatpush1.msra.mxu0 %v532
        %1457 = vmatprep.subr.mxu0 %v537
        %1458 = vmatpush1.msra.mxu0 %v536
        %1459 = vmatprep.subr.mxu0 %v541
        %1460 = vmatpush1.msra.mxu0 %v540
        %1461 = vmatprep.subr.mxu0 %v545
        %1462 = vmatpush1.msra.mxu0 %v544
        %1463 = vmatprep.subr.mxu0 %v549
        %1464 = vmatpush1.msra.mxu0 %v548
        %1465 = vmatprep.subr.mxu0 %v553
        %1466 = vmatpush1.msra.mxu0 %v552
        %1467 = vmatprep.subr.mxu0 %v557
        %1468 = vmatpush1.msra.mxu0 %v556
        %1469 = vmatprep.subr.mxu0 %v561
        %1470 = vmatpush1.msra.mxu0 %v560
        %1471 = vmatprep.subr.mxu0 %v565
        %1472 = vmatpush1.msra.mxu0 %v564
        %1473 = vmatprep.subr.mxu0 %v569
        %1474 = vmatpush1.msra.mxu0 %v568
        %1475 = vmatprep.subr.mxu0 %v573
        %1476 = vmatpush1.msra.mxu0 %v572
        %1477 = vmatprep.subr.mxu0 %v577
        %1478 = vmatpush1.msra.mxu0 %v576
        %1479 = vmatprep.subr.mxu0 %v581
        %1480 = vmatpush1.msra.mxu0 %v580
        %1481 = vmatprep.subr.mxu0 %v585
        %1482 = vmatpush1.msra.mxu0 %v584
        %1483 = vmatprep.subr.mxu0 %v589
        %1484 = vmatpush1.msra.mxu0 %v588
        %1485 = vmatprep.subr.mxu0 %v593
        %1486 = vmatpush1.msra.mxu0 %v592
        %1487 = vmatprep.subr.mxu0 %v597
        %1488 = vmatpush1.msra.mxu0 %v596
        %1489 = vmatprep.subr.mxu0 %v601
        %1490 = vmatpush1.msra.mxu0 %v600
        %1491 = vmatprep.subr.mxu0 %v605
        %1492 = vmatpush1.msra.mxu0 %v604
        %1493 = vmatprep.subr.mxu0 %v609
        %1494 = vmatpush1.msra.mxu0 %v608
        %1495 = vmatprep.subr.mxu0 %v613
        %1496 = vmatpush1.msra.mxu0 %v612
        %1497 = vmatprep.subr.mxu0 %v617
        %1498 = vmatpush1.msra.mxu0 %v616
        %1499 = vmatprep.subr.mxu0 %v621
        %1500 = vmatpush1.msra.mxu0 %v620
        %1501 = vmatprep.subr.mxu0 %v625
        %1502 = vmatpush1.msra.mxu0 %v624
        %1503 = vmatprep.subr.mxu0 %v629
        %1504 = vmatpush1.msra.mxu0 %v628
        %1505 = vmatprep.subr.mxu0 %v633
        %1506 = vmatpush1.msra.mxu0 %v632
        %1507 = vmatprep.subr.mxu0 %v637
        %1508 = vmatpush1.msra.mxu0 %v636
        %1509 = vmatprep.subr.mxu0 %v641
        %1510 = vmatpush1.msra.mxu0 %v640
        %1511 = vmatprep.mubr.f32.mxu0 %v333
        %1512 = vmatmul.mubr.f32.gmra.mrb[0].mxu0 %v332
        %v1513 = vpop.f32.mrb[0].mxu0
        %v1514 = vadd.f32 %v1401, %v1513
        %v1515 = vpop.f32.mrb[0].mxu0
        %v1516 = vadd.f32 %v1403, %v1515
        %1517 = vmatprep.mubr.f32.mxu0 %v340
        %1518 = vmatmul.mubr.f32.gmra.mrb[0].mxu0 %v339
        %v1519 = vpop.f32.mrb[0].mxu0
        %v1520 = vadd.f32 %v1407, %v1519
        %v1521 = vpop.f32.mrb[0].mxu0
        %v1522 = vadd.f32 %v1409, %v1521
        %1523 = vmatprep.mubr.f32.mxu0 %v347
        %1524 = vmatmul.mubr.f32.gmra.mrb[0].mxu0 %v346
        %v1525 = vpop.f32.mrb[0].mxu0
        %v1526 = vadd.f32 %v1413, %v1525
        %v1527 = vpop.f32.mrb[0].mxu0
        %v1528 = vadd.f32 %v1415, %v1527
        %1529 = vmatprep.mubr.f32.mxu0 %v354
        %1530 = vmatmul.mubr.f32.gmra.mrb[0].mxu0 %v353
        %v1531 = vpop.f32.mrb[0].mxu0
        %v1532 = vadd.f32 %v1419, %v1531
        %v1533 = vpop.f32.mrb[0].mxu0
        %v1534 = vadd.f32 %v1421, %v1533
        %1535 = vmatprep.mubr.f32.mxu0 %v361
        %1536 = vmatmul.mubr.f32.gmra.mrb[0].mxu0 %v360
        %v1537 = vpop.f32.mrb[0].mxu0
        %v1538 = vadd.f32 %v1425, %v1537
        %v1539 = vpop.f32.mrb[0].mxu0
        %v1540 = vadd.f32 %v1427, %v1539
        %1541 = vmatprep.mubr.f32.mxu0 %v368
        %1542 = vmatmul.mubr.f32.gmra.mrb[0].mxu0 %v367
        %v1543 = vpop.f32.mrb[0].mxu0
        %v1544 = vadd.f32 %v1431, %v1543
        %v1545 = vpop.f32.mrb[0].mxu0
        %v1546 = vadd.f32 %v1433, %v1545
        %1547 = vmatprep.mubr.f32.mxu0 %v375
        %1548 = vmatmul.mubr.f32.gmra.mrb[0].mxu0 %v374
        %v1549 = vpop.f32.mrb[0].mxu0
        %v1550 = vadd.f32 %v1437, %v1549
        %v1551 = vpop.f32.mrb[0].mxu0
        %v1552 = vadd.f32 %v1439, %v1551
        %1553 = vmatprep.mubr.f32.mxu0 %v382
        %1554 = vmatmul.mubr.f32.gmra.mrb[0].mxu0 %v381
        %v1555 = vpop.f32.mrb[0].mxu0
        %v1556 = vadd.f32 %v1443, %v1555
        %v1557 = vpop.f32.mrb[0].mxu0
        %v1558 = vadd.f32 %v1445, %v1557
        %1559 = vdwg.mxu0
        %1560 = vmatprep.subr.mxu0 %v645
        %1561 = vmatpush1.msra.mxu0 %v644
        %1562 = vmatprep.subr.mxu0 %v649
        %1563 = vmatpush1.msra.mxu0 %v648
        %1564 = vmatprep.subr.mxu0 %v653
        %1565 = vmatpush1.msra.mxu0 %v652
        %1566 = vmatprep.subr.mxu0 %v657
        %1567 = vmatpush1.msra.mxu0 %v656
        %1568 = vmatprep.subr.mxu0 %v661
        %1569 = vmatpush1.msra.mxu0 %v660
        %1570 = vmatprep.subr.mxu0 %v665
        %1571 = vmatpush1.msra.mxu0 %v664
        %1572 = vmatprep.subr.mxu0 %v669
        %1573 = vmatpush1.msra.mxu0 %v668
        %1574 = vmatprep.subr.mxu0 %v673
        %1575 = vmatpush1.msra.mxu0 %v672
        %1576 = vmatprep.subr.mxu0 %v677
        %1577 = vmatpush1.msra.mxu0 %v676
        %1578 = vmatprep.subr.mxu0 %v681
        %1579 = vmatpush1.msra.mxu0 %v680
        %1580 = vmatprep.subr.mxu0 %v685
        %1581 = vmatpush1.msra.mxu0 %v684
        %1582 = vmatprep.subr.mxu0 %v689
        %1583 = vmatpush1.msra.mxu0 %v688
        %1584 = vmatprep.subr.mxu0 %v693
        %1585 = vmatpush1.msra.mxu0 %v692
        %1586 = vmatprep.subr.mxu0 %v697
        %1587 = vmatpush1.msra.mxu0 %v696
        %1588 = vmatprep.subr.mxu0 %v701
        %1589 = vmatpush1.msra.mxu0 %v700
        %1590 = vmatprep.subr.mxu0 %v705
        %1591 = vmatpush1.msra.mxu0 %v704
        %1592 = vmatprep.subr.mxu0 %v709
        %1593 = vmatpush1.msra.mxu0 %v708
        %1594 = vmatprep.subr.mxu0 %v713
        %1595 = vmatpush1.msra.mxu0 %v712
        %1596 = vmatprep.subr.mxu0 %v717
        %1597 = vmatpush1.msra.mxu0 %v716
        %1598 = vmatprep.subr.mxu0 %v721
        %1599 = vmatpush1.msra.mxu0 %v720
        %1600 = vmatprep.subr.mxu0 %v725
        %1601 = vmatpush1.msra.mxu0 %v724
        %1602 = vmatprep.subr.mxu0 %v729
        %1603 = vmatpush1.msra.mxu0 %v728
        %1604 = vmatprep.subr.mxu0 %v733
        %1605 = vmatpush1.msra.mxu0 %v732
        %1606 = vmatprep.subr.mxu0 %v737
        %1607 = vmatpush1.msra.mxu0 %v736
        %1608 = vmatprep.subr.mxu0 %v741
        %1609 = vmatpush1.msra.mxu0 %v740
        %1610 = vmatprep.subr.mxu0 %v745
        %1611 = vmatpush1.msra.mxu0 %v744
        %1612 = vmatprep.subr.mxu0 %v749
        %1613 = vmatpush1.msra.mxu0 %v748
        %1614 = vmatprep.subr.mxu0 %v753
        %1615 = vmatpush1.msra.mxu0 %v752
        %1616 = vmatprep.subr.mxu0 %v757
        %1617 = vmatpush1.msra.mxu0 %v756
        %1618 = vmatprep.subr.mxu0 %v761
        %1619 = vmatpush1.msra.mxu0 %v760
        %1620 = vmatprep.subr.mxu0 %v765
        %1621 = vmatpush1.msra.mxu0 %v764
        %1622 = vmatprep.subr.mxu0 %v769
        %1623 = vmatpush1.msra.mxu0 %v768
        %1624 = vmatprep.mubr.f32.mxu0 %v335
        %1625 = vmatmul.mubr.f32.gmra.mrb[0].mxu0 %v334
        %v1626 = vpop.f32.mrb[0].mxu0
        %v1627 = vadd.f32 %v1514, %v1626
        %v1628 = vpop.f32.mrb[0].mxu0
        %v1629 = vadd.f32 %v1516, %v1628
        %1630 = vmatprep.mubr.f32.mxu0 %v342
        %1631 = vmatmul.mubr.f32.gmra.mrb[0].mxu0 %v341
        %v1632 = vpop.f32.mrb[0].mxu0
        %v1633 = vadd.f32 %v1520, %v1632
        %v1634 = vpop.f32.mrb[0].mxu0
        %v1635 = vadd.f32 %v1522, %v1634
        %1636 = vmatprep.mubr.f32.mxu0 %v349
        %1637 = vmatmul.mubr.f32.gmra.mrb[0].mxu0 %v348
        %v1638 = vpop.f32.mrb[0].mxu0
        %v1639 = vadd.f32 %v1526, %v1638
        %v1640 = vpop.f32.mrb[0].mxu0
        %v1641 = vadd.f32 %v1528, %v1640
        %1642 = vmatprep.mubr.f32.mxu0 %v356
        %1643 = vmatmul.mubr.f32.gmra.mrb[0].mxu0 %v355
        %v1644 = vpop.f32.mrb[0].mxu0
        %v1645 = vadd.f32 %v1532, %v1644
        %v1646 = vpop.f32.mrb[0].mxu0
        %v1647 = vadd.f32 %v1534, %v1646
        %1648 = vmatprep.mubr.f32.mxu0 %v363
        %1649 = vmatmul.mubr.f32.gmra.mrb[0].mxu0 %v362
        %v1650 = vpop.f32.mrb[0].mxu0
        %v1651 = vadd.f32 %v1538, %v1650
        %v1652 = vpop.f32.mrb[0].mxu0
        %v1653 = vadd.f32 %v1540, %v1652
        %1654 = vmatprep.mubr.f32.mxu0 %v370
        %1655 = vmatmul.mubr.f32.gmra.mrb[0].mxu0 %v369
        %v1656 = vpop.f32.mrb[0].mxu0
        %v1657 = vadd.f32 %v1544, %v1656
        %v1658 = vpop.f32.mrb[0].mxu0
        %v1659 = vadd.f32 %v1546, %v1658
        %1660 = vmatprep.mubr.f32.mxu0 %v377
        %1661 = vmatmul.mubr.f32.gmra.mrb[0].mxu0 %v376
        %v1662 = vpop.f32.mrb[0].mxu0
        %v1663 = vadd.f32 %v1550, %v1662
        %v1664 = vpop.f32.mrb[0].mxu0
        %v1665 = vadd.f32 %v1552, %v1664
        %1666 = vmatprep.mubr.f32.mxu0 %v384
        %1667 = vmatmul.mubr.f32.gmra.mrb[0].mxu0 %v383
        %v1668 = vpop.f32.mrb[0].mxu0
        %v1669 = vadd.f32 %v1556, %v1668
        %v1670 = vpop.f32.mrb[0].mxu0
        %v1671 = vadd.f32 %v1558, %v1670
        %1672 = vdwg.mxu0
        %1673 = vmatprep.subr.mxu0 %v773
        %1674 = vmatpush1.msra.mxu0 %v772
        %1675 = vmatprep.subr.mxu0 %v777
        %1676 = vmatpush1.msra.mxu0 %v776
        %1677 = vmatprep.subr.mxu0 %v781
        %1678 = vmatpush1.msra.mxu0 %v780
        %1679 = vmatprep.subr.mxu0 %v785
        %1680 = vmatpush1.msra.mxu0 %v784
        %1681 = vmatprep.subr.mxu0 %v789
        %1682 = vmatpush1.msra.mxu0 %v788
        %1683 = vmatprep.subr.mxu0 %v793
        %1684 = vmatpush1.msra.mxu0 %v792
        %1685 = vmatprep.subr.mxu0 %v797
        %1686 = vmatpush1.msra.mxu0 %v796
        %1687 = vmatprep.subr.mxu0 %v801
        %1688 = vmatpush1.msra.mxu0 %v800
        %1689 = vmatprep.subr.mxu0 %v805
        %1690 = vmatpush1.msra.mxu0 %v804
        %1691 = vmatprep.subr.mxu0 %v809
        %1692 = vmatpush1.msra.mxu0 %v808
        %1693 = vmatprep.subr.mxu0 %v813
        %1694 = vmatpush1.msra.mxu0 %v812
        %1695 = vmatprep.subr.mxu0 %v817
        %1696 = vmatpush1.msra.mxu0 %v816
        %1697 = vmatprep.subr.mxu0 %v821
        %1698 = vmatpush1.msra.mxu0 %v820
        %1699 = vmatprep.subr.mxu0 %v825
        %1700 = vmatpush1.msra.mxu0 %v824
        %1701 = vmatprep.subr.mxu0 %v829
        %1702 = vmatpush1.msra.mxu0 %v828
        %1703 = vmatprep.subr.mxu0 %v833
        %1704 = vmatpush1.msra.mxu0 %v832
        %1705 = vmatprep.subr.mxu0 0.0
        %1706 = vmatpush1.msra.mxu0 0.0
        %1707 = vmatprep.subr.mxu0 0.0
        %1708 = vmatpush1.msra.mxu0 0.0
        %1709 = vmatprep.subr.mxu0 0.0
        %1710 = vmatpush1.msra.mxu0 0.0
        %1711 = vmatprep.subr.mxu0 0.0
        %1712 = vmatpush1.msra.mxu0 0.0
        %1713 = vmatprep.subr.mxu0 0.0
        %1714 = vmatpush1.msra.mxu0 0.0
        %1715 = vmatprep.subr.mxu0 0.0
        %1716 = vmatpush1.msra.mxu0 0.0
        %1717 = vmatprep.subr.mxu0 0.0
        %1718 = vmatpush1.msra.mxu0 0.0
        %1719 = vmatprep.subr.mxu0 0.0
        %1720 = vmatpush1.msra.mxu0 0.0
        %1721 = vmatprep.subr.mxu0 0.0
        %1722 = vmatpush1.msra.mxu0 0.0
        %1723 = vmatprep.subr.mxu0 0.0
        %1724 = vmatpush1.msra.mxu0 0.0
        %1725 = vmatprep.subr.mxu0 0.0
        %1726 = vmatpush1.msra.mxu0 0.0
        %1727 = vmatprep.subr.mxu0 0.0
        %1728 = vmatpush1.msra.mxu0 0.0
        %1729 = vmatprep.subr.mxu0 0.0
        %1730 = vmatpush1.msra.mxu0 0.0
        %1731 = vmatprep.subr.mxu0 0.0
        %1732 = vmatpush1.msra.mxu0 0.0
        %1733 = vmatprep.subr.mxu0 0.0
        %1734 = vmatpush1.msra.mxu0 0.0
        %1735 = vmatprep.subr.mxu0 0.0
        %1736 = vmatpush1.msra.mxu0 0.0
        %1737 = vmatprep.mubr.f32.mxu0 0.0
        %1738 = vmatmul.mubr.f32.gmra.mrb[0].mxu0 %v336
        %v1739 = vpop.f32.mrb[0].mxu0
        %v1740 = vadd.f32 %v1627, %v1739
        %v1741 = vpop.f32.mrb[0].mxu0
        %v1742 = vadd.f32 %v1629, %v1741
        %1743 = vmatprep.mubr.f32.mxu0 0.0
        %1744 = vmatmul.mubr.f32.gmra.mrb[0].mxu0 %v343
        %v1745 = vpop.f32.mrb[0].mxu0
        %v1746 = vadd.f32 %v1633, %v1745
        %v1747 = vpop.f32.mrb[0].mxu0
        %v1748 = vadd.f32 %v1635, %v1747
        %1749 = vmatprep.mubr.f32.mxu0 0.0
        %1750 = vmatmul.mubr.f32.gmra.mrb[0].mxu0 %v350
        %v1751 = vpop.f32.mrb[0].mxu0
        %v1752 = vadd.f32 %v1639, %v1751
        %v1753 = vpop.f32.mrb[0].mxu0
        %v1754 = vadd.f32 %v1641, %v1753
        %1755 = vmatprep.mubr.f32.mxu0 0.0
        %1756 = vmatmul.mubr.f32.gmra.mrb[0].mxu0 %v357
        %v1757 = vpop.f32.mrb[0].mxu0
        %v1758 = vadd.f32 %v1645, %v1757
        %v1759 = vpop.f32.mrb[0].mxu0
        %v1760 = vadd.f32 %v1647, %v1759
        %1761 = vmatprep.mubr.f32.mxu0 0.0
        %1762 = vmatmul.mubr.f32.gmra.mrb[0].mxu0 %v364
        %v1763 = vpop.f32.mrb[0].mxu0
        %v1764 = vadd.f32 %v1651, %v1763
        %v1765 = vpop.f32.mrb[0].mxu0
        %v1766 = vadd.f32 %v1653, %v1765
        %1767 = vmatprep.mubr.f32.mxu0 0.0
        %1768 = vmatmul.mubr.f32.gmra.mrb[0].mxu0 %v371
        %v1769 = vpop.f32.mrb[0].mxu0
        %v1770 = vadd.f32 %v1657, %v1769
        %v1771 = vpop.f32.mrb[0].mxu0
        %v1772 = vadd.f32 %v1659, %v1771
        %1773 = vmatprep.mubr.f32.mxu0 0.0
        %1774 = vmatmul.mubr.f32.gmra.mrb[0].mxu0 %v378
        %v1775 = vpop.f32.mrb[0].mxu0
        %v1776 = vadd.f32 %v1663, %v1775
        %v1777 = vpop.f32.mrb[0].mxu0
        %v1778 = vadd.f32 %v1665, %v1777
        %1779 = vmatprep.mubr.f32.mxu0 0.0
        %1780 = vmatmul.mubr.f32.gmra.mrb[0].mxu0 %v385
        %v1781 = vpop.f32.mrb[0].mxu0
        %v1782 = vadd.f32 %v1669, %v1781
        %v1783 = vpop.f32.mrb[0].mxu0
        %v1784 = vadd.f32 %v1671, %v1783
        %1785 = vdwg.mxu0
        %v1786 = vmax.f32 %v1288, 0.0
        %v1787 = vmax.f32 %v1290, 0.0
        %v1788 = vmax.f32 %v1740, 0.0
        %v1789 = vmax.f32 %v1742, 0.0
        %v1790 = vmax.f32 %v1294, 0.0
        %v1791 = vmax.f32 %v1296, 0.0
        %v1792 = vmax.f32 %v1746, 0.0
        %v1793 = vmax.f32 %v1748, 0.0
        %v1794 = vmax.f32 %v1300, 0.0
        %v1795 = vmax.f32 %v1302, 0.0
        %v1796 = vmax.f32 %v1752, 0.0
        %v1797 = vmax.f32 %v1754, 0.0
        %v1798 = vmax.f32 %v1306, 0.0
        %v1799 = vmax.f32 %v1308, 0.0
        %v1800 = vmax.f32 %v1758, 0.0
        %v1801 = vmax.f32 %v1760, 0.0
        %v1802 = vmax.f32 %v1312, 0.0
        %v1803 = vmax.f32 %v1314, 0.0
        %v1804 = vmax.f32 %v1764, 0.0
        %v1805 = vmax.f32 %v1766, 0.0
        %v1806 = vmax.f32 %v1318, 0.0
        %v1807 = vmax.f32 %v1320, 0.0
        %v1808 = vmax.f32 %v1770, 0.0
        %v1809 = vmax.f32 %v1772, 0.0
        %v1810 = vmax.f32 %v1324, 0.0
        %v1811 = vmax.f32 %v1326, 0.0
        %v1812 = vmax.f32 %v1776, 0.0
        %v1813 = vmax.f32 %v1778, 0.0
        %v1814 = vmax.f32 %v1330, 0.0
        %v1815 = vmax.f32 %v1332, 0.0
        %v1816 = vmax.f32 %v1782, 0.0
        %v1817 = vmax.f32 %v1784, 0.0
        %v1818 = vld [vmem:[#allocation8] sm:$0xff]
        %v1819 = vld [vmem:[#allocation8 + $0x8] sm:$0xff]
        %v1820 = vld [vmem:[#allocation8 + $0x10] sm:$0xff]
        %v1821 = vld [vmem:[#allocation8 + $0x18] sm:$0xff]
        %v1822 = vld [vmem:[#allocation8 + $0x20] sm:$0xff]
        %v1823 = vld [vmem:[#allocation8 + $0x28] sm:$0xff]
        %v1824 = vld [vmem:[#allocation8 + $0x30] sm:$0xff]
        %v1825 = vld [vmem:[#allocation8 + $0x38] sm:$0xff]
        %v1826 = vld [vmem:[%s4] sm:$0xff]
        %v1827 = vld [vmem:[%s4 + $0x8] sm:$0xff]
        %v1828 = vld [vmem:[%s4 + $0x10] sm:$0xff]
        %v1829 = vld [vmem:[%s4 + $0x18] sm:$0xff]
        %v1830 = vld [vmem:[%s4 + $0x20] sm:$0xff]
        %v1831 = vld [vmem:[%s4 + $0x28] sm:$0xff]
        %v1832 = vld [vmem:[%s4 + $0x30] sm:$0xff]
        %v1833 = vld [vmem:[%s4 + $0x38] sm:$0xff]
        %1835 = vset.pattern.permute.xlu0 0
        %1836 = vperm.xlu0 %1835, %v1826
        %v1837 = vpop.permute.xlu0 %1836
        %1840 = vset.pattern.permute.xlu0 0
        %1841 = vperm.xlu0 %1840, %v1827
        %v1842 = vpop.permute.xlu0 %1841
        %1845 = vset.pattern.permute.xlu0 0
        %1846 = vperm.xlu0 %1845, %v1828
        %v1847 = vpop.permute.xlu0 %1846
        %1850 = vset.pattern.permute.xlu0 0
        %1851 = vperm.xlu0 %1850, %v1829
        %v1852 = vpop.permute.xlu0 %1851
        %1855 = vset.pattern.permute.xlu0 0
        %1856 = vperm.xlu0 %1855, %v1830
        %v1857 = vpop.permute.xlu0 %1856
        %1860 = vset.pattern.permute.xlu0 0
        %1861 = vperm.xlu0 %1860, %v1831
        %v1862 = vpop.permute.xlu0 %1861
        %1865 = vset.pattern.permute.xlu0 0
        %1866 = vperm.xlu0 %1865, %v1832
        %v1867 = vpop.permute.xlu0 %1866
        %1870 = vset.pattern.permute.xlu0 0
        %1871 = vperm.xlu0 %1870, %v1833
        %v1872 = vpop.permute.xlu0 %1871
        %vm1874 = vcmask 523264
        %v1876 = vsel %vm1874, %v1818, 0
        %v1879 = vsel %vm1874, %v1819, 0
        %v1882 = vsel %vm1874, %v1820, 0
        %v1885 = vsel %vm1874, %v1821, 0
        %v1888 = vsel %vm1874, %v1822, 0
        %v1891 = vsel %vm1874, %v1823, 0
        %v1894 = vsel %vm1874, %v1824, 0
        %v1897 = vsel %vm1874, %v1825, 0
        %1899 = vmatprep.subr.mxu0 %v1787
        %1900 = vmatpush1.msra.mxu0 %v1786
        %1901 = vmatprep.subr.mxu0 %v1791
        %1902 = vmatpush1.msra.mxu0 %v1790
        %1903 = vmatprep.subr.mxu0 %v1795
        %1904 = vmatpush1.msra.mxu0 %v1794
        %1905 = vmatprep.subr.mxu0 %v1799
        %1906 = vmatpush1.msra.mxu0 %v1798
        %1907 = vmatprep.subr.mxu0 %v1803
        %1908 = vmatpush1.msra.mxu0 %v1802
        %1909 = vmatprep.subr.mxu0 %v1807
        %1910 = vmatpush1.msra.mxu0 %v1806
        %1911 = vmatprep.subr.mxu0 %v1811
        %1912 = vmatpush1.msra.mxu0 %v1810
        %1913 = vmatprep.subr.mxu0 %v1815
        %1914 = vmatpush1.msra.mxu0 %v1814
        %1915 = vmatprep.subr.mxu0 0.0
        %1916 = vmatpush1.msra.mxu0 0.0
        %1917 = vmatprep.subr.mxu0 0.0
        %1918 = vmatpush1.msra.mxu0 0.0
        %1919 = vmatprep.subr.mxu0 0.0
        %1920 = vmatpush1.msra.mxu0 0.0
        %1921 = vmatprep.subr.mxu0 0.0
        %1922 = vmatpush1.msra.mxu0 0.0
        %1923 = vmatprep.subr.mxu0 0.0
        %1924 = vmatpush1.msra.mxu0 0.0
        %1925 = vmatprep.subr.mxu0 0.0
        %1926 = vmatpush1.msra.mxu0 0.0
        %1927 = vmatprep.subr.mxu0 0.0
        %1928 = vmatpush1.msra.mxu0 0.0
        %1929 = vmatprep.subr.mxu0 0.0
        %1930 = vmatpush1.msra.mxu0 0.0
        %1931 = vmatprep.subr.mxu0 0.0
        %1932 = vmatpush1.msra.mxu0 0.0
        %1933 = vmatprep.subr.mxu0 0.0
        %1934 = vmatpush1.msra.mxu0 0.0
        %1935 = vmatprep.subr.mxu0 0.0
        %1936 = vmatpush1.msra.mxu0 0.0
        %1937 = vmatprep.subr.mxu0 0.0
        %1938 = vmatpush1.msra.mxu0 0.0
        %1939 = vmatprep.subr.mxu0 0.0
        %1940 = vmatpush1.msra.mxu0 0.0
        %1941 = vmatprep.subr.mxu0 0.0
        %1942 = vmatpush1.msra.mxu0 0.0
        %1943 = vmatprep.subr.mxu0 0.0
        %1944 = vmatpush1.msra.mxu0 0.0
        %1945 = vmatprep.subr.mxu0 0.0
        %1946 = vmatpush1.msra.mxu0 0.0
        %1947 = vmatprep.subr.mxu0 0.0
        %1948 = vmatpush1.msra.mxu0 0.0
        %1949 = vmatprep.subr.mxu0 0.0
        %1950 = vmatpush1.msra.mxu0 0.0
        %1951 = vmatprep.subr.mxu0 0.0
        %1952 = vmatpush1.msra.mxu0 0.0
        %1953 = vmatprep.subr.mxu0 0.0
        %1954 = vmatpush1.msra.mxu0 0.0
        %1955 = vmatprep.subr.mxu0 0.0
        %1956 = vmatpush1.msra.mxu0 0.0
        %1957 = vmatprep.subr.mxu0 0.0
        %1958 = vmatpush1.msra.mxu0 0.0
        %1959 = vmatprep.subr.mxu0 0.0
        %1960 = vmatpush1.msra.mxu0 0.0
        %1961 = vmatprep.subr.mxu0 0.0
        %1962 = vmatpush1.msra.mxu0 0.0
        %1963 = vmatprep.mubr.f32.mxu0 0.0
        %1964 = vmatmul.mubr.f32.gmra.mrb[0].mxu0 %v1876
        %v1965 = vpop.f32.mrb[0].mxu0
        %v1966 = vadd.f32 %v1837, %v1965
        %v1967 = vpop.f32.mrb[0].mxu0
        %v1968 = vadd.f32 %v1837, %v1967
        %1969 = vmatprep.mubr.f32.mxu0 0.0
        %1970 = vmatmul.mubr.f32.gmra.mrb[0].mxu0 %v1879
        %v1971 = vpop.f32.mrb[0].mxu0
        %v1972 = vadd.f32 %v1842, %v1971
        %v1973 = vpop.f32.mrb[0].mxu0
        %v1974 = vadd.f32 %v1842, %v1973
        %1975 = vmatprep.mubr.f32.mxu0 0.0
        %1976 = vmatmul.mubr.f32.gmra.mrb[0].mxu0 %v1882
        %v1977 = vpop.f32.mrb[0].mxu0
        %v1978 = vadd.f32 %v1847, %v1977
        %v1979 = vpop.f32.mrb[0].mxu0
        %v1980 = vadd.f32 %v1847, %v1979
        %1981 = vmatprep.mubr.f32.mxu0 0.0
        %1982 = vmatmul.mubr.f32.gmra.mrb[0].mxu0 %v1885
        %v1983 = vpop.f32.mrb[0].mxu0
        %v1984 = vadd.f32 %v1852, %v1983
        %v1985 = vpop.f32.mrb[0].mxu0
        %v1986 = vadd.f32 %v1852, %v1985
        %1987 = vmatprep.mubr.f32.mxu0 0.0
        %1988 = vmatmul.mubr.f32.gmra.mrb[0].mxu0 %v1888
        %v1989 = vpop.f32.mrb[0].mxu0
        %v1990 = vadd.f32 %v1857, %v1989
        %v1991 = vpop.f32.mrb[0].mxu0
        %v1992 = vadd.f32 %v1857, %v1991
        %1993 = vmatprep.mubr.f32.mxu0 0.0
        %1994 = vmatmul.mubr.f32.gmra.mrb[0].mxu0 %v1891
        %v1995 = vpop.f32.mrb[0].mxu0
        %v1996 = vadd.f32 %v1862, %v1995
        %v1997 = vpop.f32.mrb[0].mxu0
        %v1998 = vadd.f32 %v1862, %v1997
        %1999 = vmatprep.mubr.f32.mxu0 0.0
        %2000 = vmatmul.mubr.f32.gmra.mrb[0].mxu0 %v1894
        %v2001 = vpop.f32.mrb[0].mxu0
        %v2002 = vadd.f32 %v1867, %v2001
        %v2003 = vpop.f32.mrb[0].mxu0
        %v2004 = vadd.f32 %v1867, %v2003
        %2005 = vmatprep.mubr.f32.mxu0 0.0
        %2006 = vmatmul.mubr.f32.gmra.mrb[0].mxu0 %v1897
        %v2007 = vpop.f32.mrb[0].mxu0
        %v2008 = vadd.f32 %v1872, %v2007
        %v2009 = vpop.f32.mrb[0].mxu0
        %v2010 = vadd.f32 %v1872, %v2009
        %2011 = vdwg.mxu0
        %2012 = vmatprep.subr.mxu0 %v1789
        %2013 = vmatpush1.msra.mxu0 %v1788
        %2014 = vmatprep.subr.mxu0 %v1793
        %2015 = vmatpush1.msra.mxu0 %v1792
        %2016 = vmatprep.subr.mxu0 %v1797
        %2017 = vmatpush1.msra.mxu0 %v1796
        %2018 = vmatprep.subr.mxu0 %v1801
        %2019 = vmatpush1.msra.mxu0 %v1800
        %2020 = vmatprep.subr.mxu0 %v1805
        %2021 = vmatpush1.msra.mxu0 %v1804
        %2022 = vmatprep.subr.mxu0 %v1809
        %2023 = vmatpush1.msra.mxu0 %v1808
        %2024 = vmatprep.subr.mxu0 %v1813
        %2025 = vmatpush1.msra.mxu0 %v1812
        %2026 = vmatprep.subr.mxu0 %v1817
        %2027 = vmatpush1.msra.mxu0 %v1816
        %2028 = vmatprep.subr.mxu0 0.0
        %2029 = vmatpush1.msra.mxu0 0.0
        %2030 = vmatprep.subr.mxu0 0.0
        %2031 = vmatpush1.msra.mxu0 0.0
        %2032 = vmatprep.subr.mxu0 0.0
        %2033 = vmatpush1.msra.mxu0 0.0
        %2034 = vmatprep.subr.mxu0 0.0
        %2035 = vmatpush1.msra.mxu0 0.0
        %2036 = vmatprep.subr.mxu0 0.0
        %2037 = vmatpush1.msra.mxu0 0.0
        %2038 = vmatprep.subr.mxu0 0.0
        %2039 = vmatpush1.msra.mxu0 0.0
        %2040 = vmatprep.subr.mxu0 0.0
        %2041 = vmatpush1.msra.mxu0 0.0
        %2042 = vmatprep.subr.mxu0 0.0
        %2043 = vmatpush1.msra.mxu0 0.0
        %2044 = vmatprep.subr.mxu0 0.0
        %2045 = vmatpush1.msra.mxu0 0.0
        %2046 = vmatprep.subr.mxu0 0.0
        %2047 = vmatpush1.msra.mxu0 0.0
        %2048 = vmatprep.subr.mxu0 0.0
        %2049 = vmatpush1.msra.mxu0 0.0
        %2050 = vmatprep.subr.mxu0 0.0
        %2051 = vmatpush1.msra.mxu0 0.0
        %2052 = vmatprep.subr.mxu0 0.0
        %2053 = vmatpush1.msra.mxu0 0.0
        %2054 = vmatprep.subr.mxu0 0.0
        %2055 = vmatpush1.msra.mxu0 0.0
        %2056 = vmatprep.subr.mxu0 0.0
        %2057 = vmatpush1.msra.mxu0 0.0
        %2058 = vmatprep.subr.mxu0 0.0
        %2059 = vmatpush1.msra.mxu0 0.0
        %2060 = vmatprep.subr.mxu0 0.0
        %2061 = vmatpush1.msra.mxu0 0.0
        %2062 = vmatprep.subr.mxu0 0.0
        %2063 = vmatpush1.msra.mxu0 0.0
        %2064 = vmatprep.subr.mxu0 0.0
        %2065 = vmatpush1.msra.mxu0 0.0
        %2066 = vmatprep.subr.mxu0 0.0
        %2067 = vmatpush1.msra.mxu0 0.0
        %2068 = vmatprep.subr.mxu0 0.0
        %2069 = vmatpush1.msra.mxu0 0.0
        %2070 = vmatprep.subr.mxu0 0.0
        %2071 = vmatpush1.msra.mxu0 0.0
        %2072 = vmatprep.subr.mxu0 0.0
        %2073 = vmatpush1.msra.mxu0 0.0
        %2074 = vmatprep.subr.mxu0 0.0
        %2075 = vmatpush1.msra.mxu0 0.0
        %2076 = vmatprep.mubr.f32.mxu0 0.0
        %2077 = vmatmul.mubr.f32.gmra.mrb[0].mxu0 %v1876
        %v2078 = vpop.f32.mrb[0].mxu0
        %v2079 = vadd.f32 %v1837, %v2078
        %v2080 = vpop.f32.mrb[0].mxu0
        %v2081 = vadd.f32 %v1837, %v2080
        %2082 = vmatprep.mubr.f32.mxu0 0.0
        %2083 = vmatmul.mubr.f32.gmra.mrb[0].mxu0 %v1879
        %v2084 = vpop.f32.mrb[0].mxu0
        %v2085 = vadd.f32 %v1842, %v2084
        %v2086 = vpop.f32.mrb[0].mxu0
        %v2087 = vadd.f32 %v1842, %v2086
        %2088 = vmatprep.mubr.f32.mxu0 0.0
        %2089 = vmatmul.mubr.f32.gmra.mrb[0].mxu0 %v1882
        %v2090 = vpop.f32.mrb[0].mxu0
        %v2091 = vadd.f32 %v1847, %v2090
        %v2092 = vpop.f32.mrb[0].mxu0
        %v2093 = vadd.f32 %v1847, %v2092
        %2094 = vmatprep.mubr.f32.mxu0 0.0
        %2095 = vmatmul.mubr.f32.gmra.mrb[0].mxu0 %v1885
        %v2096 = vpop.f32.mrb[0].mxu0
        %v2097 = vadd.f32 %v1852, %v2096
        %v2098 = vpop.f32.mrb[0].mxu0
        %v2099 = vadd.f32 %v1852, %v2098
        %2100 = vmatprep.mubr.f32.mxu0 0.0
        %2101 = vmatmul.mubr.f32.gmra.mrb[0].mxu0 %v1888
        %v2102 = vpop.f32.mrb[0].mxu0
        %v2103 = vadd.f32 %v1857, %v2102
        %v2104 = vpop.f32.mrb[0].mxu0
        %v2105 = vadd.f32 %v1857, %v2104
        %2106 = vmatprep.mubr.f32.mxu0 0.0
        %2107 = vmatmul.mubr.f32.gmra.mrb[0].mxu0 %v1891
        %v2108 = vpop.f32.mrb[0].mxu0
        %v2109 = vadd.f32 %v1862, %v2108
        %v2110 = vpop.f32.mrb[0].mxu0
        %v2111 = vadd.f32 %v1862, %v2110
        %2112 = vmatprep.mubr.f32.mxu0 0.0
        %2113 = vmatmul.mubr.f32.gmra.mrb[0].mxu0 %v1894
        %v2114 = vpop.f32.mrb[0].mxu0
        %v2115 = vadd.f32 %v1867, %v2114
        %v2116 = vpop.f32.mrb[0].mxu0
        %v2117 = vadd.f32 %v1867, %v2116
        %2118 = vmatprep.mubr.f32.mxu0 0.0
        %2119 = vmatmul.mubr.f32.gmra.mrb[0].mxu0 %v1897
        %v2120 = vpop.f32.mrb[0].mxu0
        %v2121 = vadd.f32 %v1872, %v2120
        %v2122 = vpop.f32.mrb[0].mxu0
        %v2123 = vadd.f32 %v1872, %v2122
        %2124 = vdwg.mxu0
        %v2125 = vmax.f32 %v1966, 0.0
        %v2126 = vmax.f32 %v1968, 0.0
        %v2127 = vmax.f32 %v2079, 0.0
        %v2128 = vmax.f32 %v2081, 0.0
        %v2129 = vmax.f32 %v1972, 0.0
        %v2130 = vmax.f32 %v1974, 0.0
        %v2131 = vmax.f32 %v2085, 0.0
        %v2132 = vmax.f32 %v2087, 0.0
        %v2133 = vmax.f32 %v1978, 0.0
        %v2134 = vmax.f32 %v1980, 0.0
        %v2135 = vmax.f32 %v2091, 0.0
        %v2136 = vmax.f32 %v2093, 0.0
        %v2137 = vmax.f32 %v1984, 0.0
        %v2138 = vmax.f32 %v1986, 0.0
        %v2139 = vmax.f32 %v2097, 0.0
        %v2140 = vmax.f32 %v2099, 0.0
        %v2141 = vmax.f32 %v1990, 0.0
        %v2142 = vmax.f32 %v1992, 0.0
        %v2143 = vmax.f32 %v2103, 0.0
        %v2144 = vmax.f32 %v2105, 0.0
        %v2145 = vmax.f32 %v1996, 0.0
        %v2146 = vmax.f32 %v1998, 0.0
        %v2147 = vmax.f32 %v2109, 0.0
        %v2148 = vmax.f32 %v2111, 0.0
        %v2149 = vmax.f32 %v2002, 0.0
        %v2150 = vmax.f32 %v2004, 0.0
        %v2151 = vmax.f32 %v2115, 0.0
        %v2152 = vmax.f32 %v2117, 0.0
        %v2153 = vmax.f32 %v2008, 0.0
        %v2154 = vmax.f32 %v2010, 0.0
        %v2155 = vmax.f32 %v2121, 0.0
        %v2156 = vmax.f32 %v2123, 0.0
        %v2157 = vld [vmem:[%s5] sm:$0xff]
        %v2158 = vld [vmem:[%s5 + $0x8] sm:$0xff]
        %v2159 = vld [vmem:[%s5 + $0x10] sm:$0xff]
        %v2160 = vld [vmem:[%s5 + $0x18] sm:$0xff]
        %v2161 = vld [vmem:[%s5 + $0x20] sm:$0xff]
        %v2162 = vld [vmem:[%s5 + $0x28] sm:$0xff]
        %v2163 = vld [vmem:[%s5 + $0x30] sm:$0xff]
        %v2164 = vld [vmem:[%s5 + $0x38] sm:$0xff]
        %2166 = vset.pattern.permute.xlu0 0
        %2167 = vperm.xlu0 %2166, %v2157
        %v2168 = vpop.permute.xlu0 %2167
        %2171 = vset.pattern.permute.xlu0 0
        %2172 = vperm.xlu0 %2171, %v2158
        %v2173 = vpop.permute.xlu0 %2172
        %2176 = vset.pattern.permute.xlu0 0
        %2177 = vperm.xlu0 %2176, %v2159
        %v2178 = vpop.permute.xlu0 %2177
        %2181 = vset.pattern.permute.xlu0 0
        %2182 = vperm.xlu0 %2181, %v2160
        %v2183 = vpop.permute.xlu0 %2182
        %2186 = vset.pattern.permute.xlu0 0
        %2187 = vperm.xlu0 %2186, %v2161
        %v2188 = vpop.permute.xlu0 %2187
        %2191 = vset.pattern.permute.xlu0 0
        %2192 = vperm.xlu0 %2191, %v2162
        %v2193 = vpop.permute.xlu0 %2192
        %2196 = vset.pattern.permute.xlu0 0
        %2197 = vperm.xlu0 %2196, %v2163
        %v2198 = vpop.permute.xlu0 %2197
        %2201 = vset.pattern.permute.xlu0 0
        %2202 = vperm.xlu0 %2201, %v2164
        %v2203 = vpop.permute.xlu0 %2202
        %v2205 = vmul.f32 %v2125, %v2168
        %v2206 = vmul.f32 %v2126, %v2168
        %v2207 = vmul.f32 %v2127, %v2168
        %v2208 = vmul.f32 %v2128, %v2168
        %v2209 = vmul.f32 %v2129, %v2173
        %v2210 = vmul.f32 %v2130, %v2173
        %v2211 = vmul.f32 %v2131, %v2173
        %v2212 = vmul.f32 %v2132, %v2173
        %v2213 = vmul.f32 %v2133, %v2178
        %v2214 = vmul.f32 %v2134, %v2178
        %v2215 = vmul.f32 %v2135, %v2178
        %v2216 = vmul.f32 %v2136, %v2178
        %v2217 = vmul.f32 %v2137, %v2183
        %v2218 = vmul.f32 %v2138, %v2183
        %v2219 = vmul.f32 %v2139, %v2183
        %v2220 = vmul.f32 %v2140, %v2183
        %v2221 = vmul.f32 %v2141, %v2188
        %v2222 = vmul.f32 %v2142, %v2188
        %v2223 = vmul.f32 %v2143, %v2188
        %v2224 = vmul.f32 %v2144, %v2188
        %v2225 = vmul.f32 %v2145, %v2193
        %v2226 = vmul.f32 %v2146, %v2193
        %v2227 = vmul.f32 %v2147, %v2193
        %v2228 = vmul.f32 %v2148, %v2193
        %v2229 = vmul.f32 %v2149, %v2198
        %v2230 = vmul.f32 %v2150, %v2198
        %v2231 = vmul.f32 %v2151, %v2198
        %v2232 = vmul.f32 %v2152, %v2198
        %v2233 = vmul.f32 %v2153, %v2203
        %v2234 = vmul.f32 %v2154, %v2203
        %v2235 = vmul.f32 %v2155, %v2203
        %v2236 = vmul.f32 %v2156, %v2203
        %v2237 = vadd.f32 %v2205, %v2209
        %v2238 = vadd.f32 %v2237, %v2213
        %v2239 = vadd.f32 %v2238, %v2217
        %v2240 = vadd.f32 %v2239, %v2221
        %v2241 = vadd.f32 %v2240, %v2225
        %v2242 = vadd.f32 %v2241, %v2229
        %v2243 = vadd.f32 %v2242, %v2233
        %v2244 = vrot.slane %v2243, 4
        %v2245 = vadd.f32 %v2243, %v2244
        %v2246 = vrot.slane %v2245, 2
        %v2247 = vadd.f32 %v2245, %v2246
        %v2248 = vrot.slane %v2247, 1
        %v2249 = vadd.f32 %v2247, %v2248
        %v2250 = vadd.f32 %v2206, %v2210
        %v2251 = vadd.f32 %v2250, %v2214
        %v2252 = vadd.f32 %v2251, %v2218
        %v2253 = vadd.f32 %v2252, %v2222
        %v2254 = vadd.f32 %v2253, %v2226
        %v2255 = vadd.f32 %v2254, %v2230
        %v2256 = vadd.f32 %v2255, %v2234
        %v2257 = vrot.slane %v2256, 4
        %v2258 = vadd.f32 %v2256, %v2257
        %v2259 = vrot.slane %v2258, 2
        %v2260 = vadd.f32 %v2258, %v2259
        %v2261 = vrot.slane %v2260, 1
        %v2262 = vadd.f32 %v2260, %v2261
        %v2263 = vadd.f32 %v2207, %v2211
        %v2264 = vadd.f32 %v2263, %v2215
        %v2265 = vadd.f32 %v2264, %v2219
        %v2266 = vadd.f32 %v2265, %v2223
        %v2267 = vadd.f32 %v2266, %v2227
        %v2268 = vadd.f32 %v2267, %v2231
        %v2269 = vadd.f32 %v2268, %v2235
        %v2270 = vrot.slane %v2269, 4
        %v2271 = vadd.f32 %v2269, %v2270
        %v2272 = vrot.slane %v2271, 2
        %v2273 = vadd.f32 %v2271, %v2272
        %v2274 = vrot.slane %v2273, 1
        %v2275 = vadd.f32 %v2273, %v2274
        %v2276 = vadd.f32 %v2208, %v2212
        %v2277 = vadd.f32 %v2276, %v2216
        %v2278 = vadd.f32 %v2277, %v2220
        %v2279 = vadd.f32 %v2278, %v2224
        %v2280 = vadd.f32 %v2279, %v2228
        %v2281 = vadd.f32 %v2280, %v2232
        %v2282 = vadd.f32 %v2281, %v2236
        %v2283 = vrot.slane %v2282, 4
        %v2284 = vadd.f32 %v2282, %v2283
        %v2285 = vrot.slane %v2284, 2
        %v2286 = vadd.f32 %v2284, %v2285
        %v2287 = vrot.slane %v2286, 1
        %v2288 = vadd.f32 %v2286, %v2287
        %v2289 = vld [vmem:[#allocation2] sm:$0x1]
        %2291 = vset.pattern.permute.xlu0 0
        %2292 = vperm.xlu0 %2291, %v2289
        %v2293 = vpop.permute.xlu0 %2292
        %v2295 = vlaneseq
        %v2296 = vshrl.u32 %v2295, 7
        %v2297 = vsub.s32 0, %v2296
        %v2298 = vrot.slane %v2293, %v2297
        %v2299 = vadd.f32 %v2249, %v2298
        %v2300 = vadd.f32 %v2262, %v2298
        %v2301 = vadd.f32 %v2275, %v2298
        %v2302 = vadd.f32 %v2288, %v2298
        %v2307 = vcombine.low %v2299, %v2300
        %v2308 = vcombine.low %v2301, %v2302
        %v2310 = vunpack.c.l.s4 1966171168
        %v2311 = vunpack.c.0.s8 %v2310
        %v2312 = vlaneseq
        %v2313 = vshrl.u32 %v2312, 7
        %v2314 = vsub.s32 %v2311, %v2313
        %v2315 = vrot.slane %v2307, %v2314
        %v2317 = vunpack.c.l.s4 1966171168
        %v2318 = vunpack.c.0.s8 %v2317
        %v2319 = vlaneseq
        %v2320 = vshrl.u32 %v2319, 7
        %v2321 = vsub.s32 %v2318, %v2320
        %v2322 = vrot.slane %v2308, %v2321
        %v2323 = vcombine.low %v2315, %v2322
        %v2325 = vunpack.c.l.s4 1966171168
        %v2326 = vunpack.c.0.s8 %v2325
        %v2327 = vlaneseq
        %v2328 = vshrl.u32 %v2327, 7
        %v2329 = vsub.s32 %v2326, %v2328
        %v2330 = vrot.slane %v2323, %v2329
        %v2332 = vlaneseq
        %vm2333 = vcmp.ge.s32.totalorder %v2332, 0
        %vm2334 = vcmp.lt.s32.totalorder %v2332, 512
        %vm2335 = vmand %vm2333, %vm2334
        %2336 = vst.msk [vmem:[%s327] sm:$0xf] %vm2335, %v2330
        %s2337 = sand.u32 %s187, 1
        %s2338 = scalar_lea.sflag [#allocation5], %s2337
        %s2339 = sand.u32 %s187, 1
        %s2340 = smul.addr %s2339, 4
        %s2341 = scalar_lea.vmem [#allocation9], %s2340
        // Predicated region
        $region61: #{tpu_custom_call.1} parent=47 // pred_check
          %p2342 = pneg %p197
        $region62: #{tpu_custom_call.1} parent=47 // pred_check_branch
          %2344 = sbr.rel (%p2342) target = $region64
        $region63: #{tpu_custom_call.1} parent=47 // pred_region
          %s2345 = smul.u32 4, %s27
          %s2347 = ssub.s32 64, 64
          %2348 = vsyncadd %s2338, %s2347
          %s2349 = smul.addr %s2345, 16
          %s2350 = scalar_lea.hbm %s7, %s2349
          %s2352 = sshll.u32 %s2341, 4
          %s2353 = int_to_ptr.vmem [resolvable:$true] %s2352
          %2355 = dma.vmem_to_hbm [thread:$0]  %s2353, 64, %s2350, %s2338
        $region64: #{tpu_custom_call.1} parent=47 // pred_fallthru
          _
      $region48: #{tpu_custom_call.1} parent=5 // pred_fallthru
        _
      %p2356 = scmp.le.s32.totalorder 2, %s22
      // Predicated region
      $region65: #{tpu_custom_call.1} parent=5 // pred_check
        %p2357 = pneg %p2356
      $region66: #{tpu_custom_call.1} parent=5 // pred_check_branch
        %2359 = sbr.rel (%p2357) target = $region68
      $region67: #{tpu_custom_call.1} parent=5 // pred_region
        %s2360 = ssub.s32 %s22, 2
        // Predicated region
        $region69: #{tpu_custom_call.1} parent=67 // pred_check
          %p2361 = pneg %p203
        $region70: #{tpu_custom_call.1} parent=67 // pred_check_branch
          %2363 = sbr.rel (%p2361) target = $region72
        $region71: #{tpu_custom_call.1} parent=67 // pred_region
          %s2364 = sand.u32 %s188, 1
          %s2365 = scalar_lea.sflag [#allocation5], %s2364
          %s2366 = sand.u32 %s188, 1
          %s2367 = smul.addr %s2366, 4
          %s2368 = scalar_lea.vmem [#allocation9], %s2367
          %2369 = dma.done %s2365, 64
        $region72: #{tpu_custom_call.1} parent=67 // pred_fallthru
          _
      $region68: #{tpu_custom_call.1} parent=5 // pred_fallthru
        _
    $region6: #{tpu_custom_call.1} parent=1 // loop_footer
      %s26 = sadd.s32 1, %s22
    $region7: #{tpu_custom_call.1} parent=1 // loop_footer_branch
      %21 = sbr.rel target = $region3
    $region8: #{tpu_custom_call.1} parent=1 // loop_exit
      _
    %2370 = vsyncpa [#allocation4], 1
    %s2371 = scalar_lea.sflag [#allocation4], 1
    %2372 = vsyncpa %s2371, 1
    %2373 = vsyncpa [#allocation7], 1
    %2374 = vsyncpa [#allocation5], 1
    %s2375 = scalar_lea.sflag [#allocation5], 1
    %2376 = vsyncpa %s2375, 1

</llo_original>
